<compile_context>
chip_gen: v7x
topology: tpu7x:2x2x1
jax: 0.10.0
libtpu: 0.0.40
codegen_flags: <defaults>
</compile_context>

<pallas_src>
import jax
import jax.numpy as jnp
from jax.experimental import pallas as pl
from jax.experimental.pallas import tpu as pltpu


def _cbam_kernel(x_ref, w1t_ref, w2_ref, ws_ref, bs_ref, o_ref):
    Bb, C, L = x_ref.shape
    Cr = w1t_ref.shape[1]
    K = ws_ref.shape[1]
    pad = K // 2

    # ---- Hoisted, batch-independent constants (built once per grid step) ----
    # Spatial-conv tap weights with the Conv1d zero padding folded in:
    #   row 0 multiplies the max-pool row, row 1 the avg-pool row of the (2, L) slab.
    lane = jax.lax.broadcasted_iota(jnp.int32, (2, L), 1)
    row = jax.lax.broadcasted_iota(jnp.int32, (2, L), 0)
    tap_w = []
    for k in range(K):
        s = pad - k                                      # static shift of this tap
        w = jnp.where(row == 0, ws_ref[0, k], ws_ref[1, k])      # (2, L)
        if s > 0:
            w = jnp.where(lane >= s, w, 0.0)             # left zero padding
        elif s < 0:
            w = jnp.where(lane < L + s, w, 0.0)          # right zero padding
        tap_w.append(w)
    bias = bs_ref[0]

    # SE weights (tiny): w1t is Conv1d(C, Cr, 1).weight transposed -> (C, Cr),
    # w2 is Conv1d(Cr, C, 1).weight -> (C, Cr). Lane slices give (C, 1) columns.
    w1t = w1t_ref[...].astype(jnp.float32)               # (C, Cr)
    w2 = w2_ref[...].astype(jnp.float32)                 # (C, Cr)

    # ---- One fused pass per batch plane ----
    for b in range(Bb):                                   # Bb static, modest unroll
        xb = x_ref[b].astype(jnp.float32)                 # (C, L)

        # Channel attention (SE) on the VPU/XLU only — no MXU.
        pm = jnp.max(xb, axis=1, keepdims=True)           # (C, 1) AdaptiveMaxPool1d(1)
        pa = jnp.mean(xb, axis=1, keepdims=True)          # (C, 1) AdaptiveAvgPool1d(1)
        pooled = jnp.concatenate([pm, pa], axis=1)        # (C, 2): [max | avg]
        y = jnp.zeros((C, 1), jnp.float32)
        for r in range(Cr):                                # Cr is tiny (C // reduction)
            hr = jnp.sum(w1t[:, r:r + 1] * pooled, axis=0, keepdims=True)   # (1, 2)
            hr = jnp.maximum(hr, 0.0)                      # ReLU per SE branch
            # se(max) + se(avg) commutes with the (linear) second conv:
            y = y + w2[:, r:r + 1] * (hr[:, 0:1] + hr[:, 1:2])              # (C, 1)
        cab = jax.nn.sigmoid(y)                            # (C, 1) channel gate
        out1 = xb * cab                                    # (C, L)

        # Spatial attention: channel pools packed into one (2, L) slab so each tap
        # needs one roll; padding masks are already folded into tap_w.
        mxc = jnp.max(out1, axis=0, keepdims=True)         # (1, L)
        avc = jnp.mean(out1, axis=0, keepdims=True)        # (1, L)
        slab = jnp.concatenate([mxc, avc], axis=0)         # (2, L)
        acc = jnp.zeros((2, L), jnp.float32)
        for k in range(K):                                 # K is small (7), unrolled
            s = pad - k
            sh = s % L
            rolled = slab if sh == 0 else pltpu.roll(slab, shift=sh, axis=1)
            acc = acc + tap_w[k] * rolled
        conv = jnp.sum(acc, axis=0, keepdims=True) + bias  # (1, L)
        sa = jax.nn.sigmoid(conv)

        # Spatial gate + residual (single store per batch plane).
        o_ref[b] = (out1 * sa + xb).astype(o_ref.dtype)


def _hw_params():
    """(vmem_capacity_bytes, tensorcores) with safe fallbacks."""
    vmem_cap = 128 * 1024 * 1024
    num_cores = 1
    try:
        info = pltpu.get_tpu_info()
        cap = getattr(info, "vmem_capacity_bytes", None)
        if isinstance(cap, int) and cap > 0:
            vmem_cap = cap
        nc = None
        for attr in ("num_cores", "tensor_cores_per_chip", "num_tensorcores",
                     "cores_per_chip"):
            v = getattr(info, attr, None)
            if isinstance(v, int) and v > 0:
                nc = v
                break
        if nc is None:
            # v7x-class chips pair 2 TensorCores with 64 MiB VMEM per core.
            nc = 2 if vmem_cap <= 64 * 1024 * 1024 else 1
        num_cores = nc
    except Exception:
        pass
    return vmem_cap, num_cores


def _vmem_params(vmem_cap):
    """(per-step block budget, vmem_limit_bytes), generation aware."""
    if vmem_cap <= 64 * 1024 * 1024:            # v7x-class: 64 MiB per TensorCore
        return 10 * 1024 * 1024, 40 * 1024 * 1024
    return 28 * 1024 * 1024, 64 * 1024 * 1024   # v5e / v6e: 128 MiB VMEM


def _pick_block_b(B, C, L, itemsize, budget, num_cores, max_unroll=32):
    """Largest batch-block that fits the budget, keeps >=2 grid steps per core
    (DMA/compute overlap) and targets big (>=0.5 MiB) per-step blocks when B allows."""
    plane_io = C * L * itemsize
    plane_f32 = C * L * 4
    fixed = 8 * plane_f32                 # fused per-batch f32 working set + headroom
    per_b = 4 * plane_io                  # double-buffered input + output blocks
    if fixed + per_b > budget:
        # TODO(synk): tile over L (and C) instead of failing for very large planes.
        raise ValueError(
            "CBAM Pallas kernel: a single (C, L) plane exceeds the VMEM budget; "
            "this shape needs an additional C/L tiling axis.")
    fit = int(min(max_unroll, (budget - fixed) // per_b))
    divs = [d for d in range(1, B + 1) if B % d == 0 and d <= fit]
    good = [d for d in divs if B // d >= 2 * num_cores]
    return max(good) if good else max(divs)


def cbam_block(x, w1, w2, ws, bs, *, block_b=None):
    """CBAMBlock forward. x: (B, C, L); w1: (Cr, C); w2: (C, Cr); ws: (2, K); bs: (1,)."""
    B, C, L = x.shape
    Cr = w1.shape[0]
    K = ws.shape[1]
    assert w1.shape == (Cr, C) and w2.shape == (C, Cr) and ws.shape == (2, K)
    assert L > K // 2, "spatial-conv roll trick assumes L > kernel_size // 2"

    vmem_cap, num_cores = _hw_params()
    budget, vmem_limit = _vmem_params(vmem_cap)
    if block_b is None:
        block_b = _pick_block_b(B, C, L, x.dtype.itemsize, budget, num_cores)
    assert B % block_b == 0, "block_b must divide the batch size"
    grid = (B // block_b,)

    # Deeper input pipelining once blocks are big and VMEM is plentiful (v5e/v6e).
    block_bytes = block_b * C * L * x.dtype.itemsize
    x_spec_kwargs = {}
    if block_bytes >= (1 << 20) and vmem_cap >= 128 * 1024 * 1024:
        x_spec_kwargs["pipeline_mode"] = pl.Buffered(3)

    w1t = w1.T  # (C, Cr): lets the kernel take lane slices instead of transposing.

    return pl.pallas_call(
        _cbam_kernel,
        out_shape=jax.ShapeDtypeStruct((B, C, L), x.dtype),
        grid=grid,
        in_specs=[
            pl.BlockSpec((block_b, C, L), lambda i: (i, 0, 0), **x_spec_kwargs),
            pl.BlockSpec((C, Cr), lambda i: (0, 0)),                   # w1.T
            pl.BlockSpec((C, Cr), lambda i: (0, 0)),                   # w2
            pl.BlockSpec(memory_space=pltpu.MemorySpace.SMEM),         # ws: scalar taps
            pl.BlockSpec(memory_space=pltpu.MemorySpace.SMEM),         # bs: scalar bias
        ],
        out_specs=pl.BlockSpec((block_b, C, L), lambda i: (i, 0, 0)),
        compiler_params=pltpu.CompilerParams(
            dimension_semantics=("parallel",),
            vmem_limit_bytes=vmem_limit,
        ),
    )(x, w1t, w2, ws, bs)


def cbam_ref(x, w1, w2, ws, bs):
    """Pure-JAX reference matching the PyTorch forward."""
    K = ws.shape[1]
    mx = jnp.max(x, axis=2, keepdims=True)
    av = jnp.mean(x, axis=2, keepdims=True)

    def se(v):  # (B, C, 1)
        h = jnp.maximum(jnp.einsum('rc,bco->bro', w1, v), 0.0)
        return jnp.einsum('cr,bro->bco', w2, h)

    ca = jax.nn.sigmoid(se(mx) + se(av))
    out1 = x * ca
    mxc = jnp.max(out1, axis=1, keepdims=True)
    avc = jnp.mean(out1, axis=1, keepdims=True)
    cat = jnp.concatenate([mxc, avc], axis=1)                 # (B, 2, L)
    conv = jax.lax.conv_general_dilated(
        cat, ws.reshape(1, 2, K), window_strides=(1,),
        padding=[(K // 2, K // 2)],
        dimension_numbers=('NCH', 'OIH', 'NCH'))
    conv = conv + bs.reshape(1, 1, 1)
    sa = jax.nn.sigmoid(conv)
    return out1 * sa + x


if __name__ == "__main__":
    B, C, L = 8, 32, 128          # L lane-dense (multiple of 128), C multiple of 8
    reduction, K = 16, 7
    Cr = C // reduction

    key = jax.random.PRNGKey(0)
    kx, k1, k2, k3 = jax.random.split(key, 4)
    x = jax.random.normal(kx, (B, C, L), dtype=jnp.float32)
    # Deterministic synthetic parameters (kaiming-like scaling).
    w1 = jax.random.normal(k1, (Cr, C), dtype=jnp.float32) * (2.0 / C) ** 0.5
    w2 = jax.random.normal(k2, (C, Cr), dtype=jnp.float32) * (2.0 / Cr) ** 0.5
    ws = jax.random.normal(k3, (2, K), dtype=jnp.float32) * (2.0 / (2 * K)) ** 0.5
    bs = jnp.full((1,), 0.1, dtype=jnp.float32)

    out = jax.block_until_ready(cbam_block(x, w1, w2, ws, bs))
    ref = jax.block_until_ready(cbam_ref(x, w1, w2, ws, bs))

    assert out.shape == x.shape and out.dtype == x.dtype
    assert jnp.allclose(out, ref, rtol=1e-5, atol=1e-5), "mismatch vs reference"
    print("KERNEL_OK")
</pallas_src>

<mosaic_0001>
module attributes {stable_mosaic.version = 11 : i64} {
  func.func @_cbam_kernel(%arg0: i32, %arg1: memref<4x32x128xf32, #tpu.memory_space<vmem>>, %arg2: memref<32x2xf32, #tpu.memory_space<vmem>>, %arg3: memref<32x2xf32, #tpu.memory_space<vmem>>, %arg4: memref<2x7xf32, #tpu.memory_space<smem>>, %arg5: memref<1xf32, #tpu.memory_space<smem>>, %arg6: memref<4x32x128xf32, #tpu.memory_space<vmem>>) attributes {dimension_semantics = [#tpu.dimension_semantics<parallel>], iteration_bounds = array<i64: 2>, scalar_prefetch = 0 : i64, scratch_operands = 0 : i64, tpu.core_type = #tpu.core_type<tc>, window_params = [{transform_indices = @transform_0, window_bounds = array<i64: 4, 32, 128>}, {pipeline_mode = #tpu.pipeline_mode<synchronous>, transform_indices = @transform_1, window_bounds = array<i64: 32, 2>}, {pipeline_mode = #tpu.pipeline_mode<synchronous>, transform_indices = @transform_2, window_bounds = array<i64: 32, 2>}, {transform_indices = @transform_3, window_bounds = array<i64: 2, 7>}, {transform_indices = @transform_4, window_bounds = array<i64: 1>}, {transform_indices = @transform_5, window_bounds = array<i64: 4, 32, 128>}]} {
    %0 = tpu.iota {dimensions = array<i32: 1>} : vector<2x128xi32>
    %1 = tpu.iota {dimensions = array<i32: 0>} : vector<2x128xi32>
    %c0_i32 = arith.constant 0 : i32
    %2 = vector.broadcast %c0_i32 : i32 to vector<2x128xi32>
    %3 = arith.cmpi eq, %1, %2 : vector<2x128xi32>
    %c0 = arith.constant 0 : index
    %c0_0 = arith.constant 0 : index
    %4 = memref.load %arg4[%c0, %c0_0] : memref<2x7xf32, #tpu.memory_space<smem>>
    %c1 = arith.constant 1 : index
    %c0_1 = arith.constant 0 : index
    %5 = memref.load %arg4[%c1, %c0_1] : memref<2x7xf32, #tpu.memory_space<smem>>
    %6 = vector.broadcast %4 : f32 to vector<2x128xf32>
    %7 = vector.broadcast %5 : f32 to vector<2x128xf32>
    %8 = arith.select %3, %6, %7 : vector<2x128xi1>, vector<2x128xf32>
    %c3_i32 = arith.constant 3 : i32
    %9 = vector.broadcast %c3_i32 : i32 to vector<2x128xi32>
    %10 = arith.cmpi sge, %0, %9 : vector<2x128xi32>
    %cst = arith.constant 0.000000e+00 : f32
    %11 = vector.broadcast %cst : f32 to vector<2x128xf32>
    %12 = arith.select %10, %8, %11 : vector<2x128xi1>, vector<2x128xf32>
    %c0_i32_2 = arith.constant 0 : i32
    %13 = vector.broadcast %c0_i32_2 : i32 to vector<2x128xi32>
    %14 = arith.cmpi eq, %1, %13 : vector<2x128xi32>
    %c0_3 = arith.constant 0 : index
    %c1_4 = arith.constant 1 : index
    %15 = memref.load %arg4[%c0_3, %c1_4] : memref<2x7xf32, #tpu.memory_space<smem>>
    %c1_5 = arith.constant 1 : index
    %c1_6 = arith.constant 1 : index
    %16 = memref.load %arg4[%c1_5, %c1_6] : memref<2x7xf32, #tpu.memory_space<smem>>
    %17 = vector.broadcast %15 : f32 to vector<2x128xf32>
    %18 = vector.broadcast %16 : f32 to vector<2x128xf32>
    %19 = arith.select %14, %17, %18 : vector<2x128xi1>, vector<2x128xf32>
    %c2_i32 = arith.constant 2 : i32
    %20 = vector.broadcast %c2_i32 : i32 to vector<2x128xi32>
    %21 = arith.cmpi sge, %0, %20 : vector<2x128xi32>
    %cst_7 = arith.constant 0.000000e+00 : f32
    %22 = vector.broadcast %cst_7 : f32 to vector<2x128xf32>
    %23 = arith.select %21, %19, %22 : vector<2x128xi1>, vector<2x128xf32>
    %c0_i32_8 = arith.constant 0 : i32
    %24 = vector.broadcast %c0_i32_8 : i32 to vector<2x128xi32>
    %25 = arith.cmpi eq, %1, %24 : vector<2x128xi32>
    %c0_9 = arith.constant 0 : index
    %c2 = arith.constant 2 : index
    %26 = memref.load %arg4[%c0_9, %c2] : memref<2x7xf32, #tpu.memory_space<smem>>
    %c1_10 = arith.constant 1 : index
    %c2_11 = arith.constant 2 : index
    %27 = memref.load %arg4[%c1_10, %c2_11] : memref<2x7xf32, #tpu.memory_space<smem>>
    %28 = vector.broadcast %26 : f32 to vector<2x128xf32>
    %29 = vector.broadcast %27 : f32 to vector<2x128xf32>
    %30 = arith.select %25, %28, %29 : vector<2x128xi1>, vector<2x128xf32>
    %c1_i32 = arith.constant 1 : i32
    %31 = vector.broadcast %c1_i32 : i32 to vector<2x128xi32>
    %32 = arith.cmpi sge, %0, %31 : vector<2x128xi32>
    %cst_12 = arith.constant 0.000000e+00 : f32
    %33 = vector.broadcast %cst_12 : f32 to vector<2x128xf32>
    %34 = arith.select %32, %30, %33 : vector<2x128xi1>, vector<2x128xf32>
    %c0_i32_13 = arith.constant 0 : i32
    %35 = vector.broadcast %c0_i32_13 : i32 to vector<2x128xi32>
    %36 = arith.cmpi eq, %1, %35 : vector<2x128xi32>
    %c0_14 = arith.constant 0 : index
    %c3 = arith.constant 3 : index
    %37 = memref.load %arg4[%c0_14, %c3] : memref<2x7xf32, #tpu.memory_space<smem>>
    %c1_15 = arith.constant 1 : index
    %c3_16 = arith.constant 3 : index
    %38 = memref.load %arg4[%c1_15, %c3_16] : memref<2x7xf32, #tpu.memory_space<smem>>
    %39 = vector.broadcast %37 : f32 to vector<2x128xf32>
    %40 = vector.broadcast %38 : f32 to vector<2x128xf32>
    %41 = arith.select %36, %39, %40 : vector<2x128xi1>, vector<2x128xf32>
    %c0_i32_17 = arith.constant 0 : i32
    %42 = vector.broadcast %c0_i32_17 : i32 to vector<2x128xi32>
    %43 = arith.cmpi eq, %1, %42 : vector<2x128xi32>
    %c0_18 = arith.constant 0 : index
    %c4 = arith.constant 4 : index
    %44 = memref.load %arg4[%c0_18, %c4] : memref<2x7xf32, #tpu.memory_space<smem>>
    %c1_19 = arith.constant 1 : index
    %c4_20 = arith.constant 4 : index
    %45 = memref.load %arg4[%c1_19, %c4_20] : memref<2x7xf32, #tpu.memory_space<smem>>
    %46 = vector.broadcast %44 : f32 to vector<2x128xf32>
    %47 = vector.broadcast %45 : f32 to vector<2x128xf32>
    %48 = arith.select %43, %46, %47 : vector<2x128xi1>, vector<2x128xf32>
    %c127_i32 = arith.constant 127 : i32
    %49 = vector.broadcast %c127_i32 : i32 to vector<2x128xi32>
    %50 = arith.cmpi slt, %0, %49 : vector<2x128xi32>
    %cst_21 = arith.constant 0.000000e+00 : f32
    %51 = vector.broadcast %cst_21 : f32 to vector<2x128xf32>
    %52 = arith.select %50, %48, %51 : vector<2x128xi1>, vector<2x128xf32>
    %c0_i32_22 = arith.constant 0 : i32
    %53 = vector.broadcast %c0_i32_22 : i32 to vector<2x128xi32>
    %54 = arith.cmpi eq, %1, %53 : vector<2x128xi32>
    %c0_23 = arith.constant 0 : index
    %c5 = arith.constant 5 : index
    %55 = memref.load %arg4[%c0_23, %c5] : memref<2x7xf32, #tpu.memory_space<smem>>
    %c1_24 = arith.constant 1 : index
    %c5_25 = arith.constant 5 : index
    %56 = memref.load %arg4[%c1_24, %c5_25] : memref<2x7xf32, #tpu.memory_space<smem>>
    %57 = vector.broadcast %55 : f32 to vector<2x128xf32>
    %58 = vector.broadcast %56 : f32 to vector<2x128xf32>
    %59 = arith.select %54, %57, %58 : vector<2x128xi1>, vector<2x128xf32>
    %c126_i32 = arith.constant 126 : i32
    %60 = vector.broadcast %c126_i32 : i32 to vector<2x128xi32>
    %61 = arith.cmpi slt, %0, %60 : vector<2x128xi32>
    %cst_26 = arith.constant 0.000000e+00 : f32
    %62 = vector.broadcast %cst_26 : f32 to vector<2x128xf32>
    %63 = arith.select %61, %59, %62 : vector<2x128xi1>, vector<2x128xf32>
    %c0_i32_27 = arith.constant 0 : i32
    %64 = vector.broadcast %c0_i32_27 : i32 to vector<2x128xi32>
    %65 = arith.cmpi eq, %1, %64 : vector<2x128xi32>
    %c0_28 = arith.constant 0 : index
    %c6 = arith.constant 6 : index
    %66 = memref.load %arg4[%c0_28, %c6] : memref<2x7xf32, #tpu.memory_space<smem>>
    %c1_29 = arith.constant 1 : index
    %c6_30 = arith.constant 6 : index
    %67 = memref.load %arg4[%c1_29, %c6_30] : memref<2x7xf32, #tpu.memory_space<smem>>
    %68 = vector.broadcast %66 : f32 to vector<2x128xf32>
    %69 = vector.broadcast %67 : f32 to vector<2x128xf32>
    %70 = arith.select %65, %68, %69 : vector<2x128xi1>, vector<2x128xf32>
    %c125_i32 = arith.constant 125 : i32
    %71 = vector.broadcast %c125_i32 : i32 to vector<2x128xi32>
    %72 = arith.cmpi slt, %0, %71 : vector<2x128xi32>
    %cst_31 = arith.constant 0.000000e+00 : f32
    %73 = vector.broadcast %cst_31 : f32 to vector<2x128xf32>
    %74 = arith.select %72, %70, %73 : vector<2x128xi1>, vector<2x128xf32>
    %c0_32 = arith.constant 0 : index
    %75 = memref.load %arg5[%c0_32] : memref<1xf32, #tpu.memory_space<smem>>
    %c0_33 = arith.constant 0 : index
    %c0_34 = arith.constant 0 : index
    %76 = vector.load %arg2[%c0_33, %c0_34] : memref<32x2xf32, #tpu.memory_space<vmem>>, vector<32x2xf32>
    %c0_35 = arith.constant 0 : index
    %c0_36 = arith.constant 0 : index
    %77 = vector.load %arg3[%c0_35, %c0_36] : memref<32x2xf32, #tpu.memory_space<vmem>>, vector<32x2xf32>
    %c0_37 = arith.constant 0 : index
    %c0_38 = arith.constant 0 : index
    %c0_39 = arith.constant 0 : index
    %78 = vector.load %arg1[%c0_37, %c0_38, %c0_39] : memref<4x32x128xf32, #tpu.memory_space<vmem>>, vector<1x32x128xf32>
    %79 = vector.shape_cast %78 : vector<1x32x128xf32> to vector<32x128xf32>
    %cst_40 = arith.constant dense<0xFF800000> : vector<32xf32>
    %80 = vector.multi_reduction <maximumf>, %79, %cst_40 [1] : vector<32x128xf32> to vector<32xf32>
    %81 = vector.shape_cast %80 : vector<32xf32> to vector<32x1xf32>
    %cst_41 = arith.constant dense<0.000000e+00> : vector<32xf32>
    %82 = vector.multi_reduction <add>, %79, %cst_41 [1] : vector<32x128xf32> to vector<32xf32>
    %83 = vector.shape_cast %82 : vector<32xf32> to vector<32x1xf32>
    %cst_42 = arith.constant 1.280000e+02 : f32
    %84 = vector.broadcast %cst_42 : f32 to vector<32x1xf32>
    %85 = arith.divf %83, %84 : vector<32x1xf32>
    %86 = tpu.concatenate %81, %85 in 1 : vector<32x1xf32>, vector<32x1xf32> -> vector<32x2xf32>
    %cst_43 = arith.constant 0.000000e+00 : f32
    %87 = vector.broadcast %cst_43 : f32 to vector<32x1xf32>
    %88 = vector.extract_strided_slice %76 {offsets = [0, 0], sizes = [32, 1], strides = [1, 1]} : vector<32x2xf32> to vector<32x1xf32>
    %89 = vector.broadcast %88 : vector<32x1xf32> to vector<32x2xf32>
    %90 = arith.mulf %89, %86 : vector<32x2xf32>
    %cst_44 = arith.constant dense<0.000000e+00> : vector<2xf32>
    %91 = vector.multi_reduction <add>, %90, %cst_44 [0] : vector<32x2xf32> to vector<2xf32>
    %92 = vector.shape_cast %91 : vector<2xf32> to vector<1x2xf32>
    %cst_45 = arith.constant 0.000000e+00 : f32
    %93 = vector.broadcast %cst_45 : f32 to vector<1x2xf32>
    %94 = arith.maximumf %92, %93 : vector<1x2xf32>
    %95 = vector.extract_strided_slice %77 {offsets = [0, 0], sizes = [32, 1], strides = [1, 1]} : vector<32x2xf32> to vector<32x1xf32>
    %96 = vector.extract_strided_slice %94 {offsets = [0, 0], sizes = [1, 1], strides = [1, 1]} : vector<1x2xf32> to vector<1x1xf32>
    %97 = vector.extract_strided_slice %94 {offsets = [0, 1], sizes = [1, 1], strides = [1, 1]} : vector<1x2xf32> to vector<1x1xf32>
    %98 = arith.addf %96, %97 : vector<1x1xf32>
    %99 = vector.broadcast %98 : vector<1x1xf32> to vector<32x1xf32>
    %100 = arith.mulf %95, %99 : vector<32x1xf32>
    %101 = arith.addf %87, %100 : vector<32x1xf32>
    %102 = vector.extract_strided_slice %76 {offsets = [0, 1], sizes = [32, 1], strides = [1, 1]} : vector<32x2xf32> to vector<32x1xf32>
    %103 = vector.broadcast %102 : vector<32x1xf32> to vector<32x2xf32>
    %104 = arith.mulf %103, %86 : vector<32x2xf32>
    %cst_46 = arith.constant dense<0.000000e+00> : vector<2xf32>
    %105 = vector.multi_reduction <add>, %104, %cst_46 [0] : vector<32x2xf32> to vector<2xf32>
    %106 = vector.shape_cast %105 : vector<2xf32> to vector<1x2xf32>
    %cst_47 = arith.constant 0.000000e+00 : f32
    %107 = vector.broadcast %cst_47 : f32 to vector<1x2xf32>
    %108 = arith.maximumf %106, %107 : vector<1x2xf32>
    %109 = vector.extract_strided_slice %77 {offsets = [0, 1], sizes = [32, 1], strides = [1, 1]} : vector<32x2xf32> to vector<32x1xf32>
    %110 = vector.extract_strided_slice %108 {offsets = [0, 0], sizes = [1, 1], strides = [1, 1]} : vector<1x2xf32> to vector<1x1xf32>
    %111 = vector.extract_strided_slice %108 {offsets = [0, 1], sizes = [1, 1], strides = [1, 1]} : vector<1x2xf32> to vector<1x1xf32>
    %112 = arith.addf %110, %111 : vector<1x1xf32>
    %113 = vector.broadcast %112 : vector<1x1xf32> to vector<32x1xf32>
    %114 = arith.mulf %109, %113 : vector<32x1xf32>
    %115 = arith.addf %101, %114 : vector<32x1xf32>
    %116 = arith.negf %115 : vector<32x1xf32>
    %117 = math.exp %116 : vector<32x1xf32>
    %cst_48 = arith.constant 1.000000e+00 : f32
    %118 = vector.broadcast %cst_48 : f32 to vector<32x1xf32>
    %119 = arith.addf %118, %117 : vector<32x1xf32>
    %120 = arith.divf %118, %119 : vector<32x1xf32>
    %121 = vector.broadcast %120 : vector<32x1xf32> to vector<32x128xf32>
    %122 = arith.mulf %79, %121 : vector<32x128xf32>
    %cst_49 = arith.constant dense<0xFF800000> : vector<128xf32>
    %123 = vector.multi_reduction <maximumf>, %122, %cst_49 [0] : vector<32x128xf32> to vector<128xf32>
    %124 = vector.shape_cast %123 : vector<128xf32> to vector<1x128xf32>
    %cst_50 = arith.constant dense<0.000000e+00> : vector<128xf32>
    %125 = vector.multi_reduction <add>, %122, %cst_50 [0] : vector<32x128xf32> to vector<128xf32>
    %126 = vector.shape_cast %125 : vector<128xf32> to vector<1x128xf32>
    %cst_51 = arith.constant 3.200000e+01 : f32
    %127 = vector.broadcast %cst_51 : f32 to vector<1x128xf32>
    %128 = arith.divf %126, %127 : vector<1x128xf32>
    %129 = tpu.concatenate %124, %128 in 0 : vector<1x128xf32>, vector<1x128xf32> -> vector<2x128xf32>
    %cst_52 = arith.constant 0.000000e+00 : f32
    %130 = vector.broadcast %cst_52 : f32 to vector<2x128xf32>
    %c3_i32_53 = arith.constant 3 : i32
    %131 = tpu.dynamic_rotate %129 by %c3_i32_53 dim 1 : vector<2x128xf32>, i32 -> vector<2x128xf32>
    %132 = arith.mulf %12, %131 : vector<2x128xf32>
    %133 = arith.addf %130, %132 : vector<2x128xf32>
    %c2_i32_54 = arith.constant 2 : i32
    %134 = tpu.dynamic_rotate %129 by %c2_i32_54 dim 1 : vector<2x128xf32>, i32 -> vector<2x128xf32>
    %135 = arith.mulf %23, %134 : vector<2x128xf32>
    %136 = arith.addf %133, %135 : vector<2x128xf32>
    %c1_i32_55 = arith.constant 1 : i32
    %137 = tpu.dynamic_rotate %129 by %c1_i32_55 dim 1 : vector<2x128xf32>, i32 -> vector<2x128xf32>
    %138 = arith.mulf %34, %137 : vector<2x128xf32>
    %139 = arith.addf %136, %138 : vector<2x128xf32>
    %140 = arith.mulf %41, %129 : vector<2x128xf32>
    %141 = arith.addf %139, %140 : vector<2x128xf32>
    %c127_i32_56 = arith.constant 127 : i32
    %142 = tpu.dynamic_rotate %129 by %c127_i32_56 dim 1 : vector<2x128xf32>, i32 -> vector<2x128xf32>
    %143 = arith.mulf %52, %142 : vector<2x128xf32>
    %144 = arith.addf %141, %143 : vector<2x128xf32>
    %c126_i32_57 = arith.constant 126 : i32
    %145 = tpu.dynamic_rotate %129 by %c126_i32_57 dim 1 : vector<2x128xf32>, i32 -> vector<2x128xf32>
    %146 = arith.mulf %63, %145 : vector<2x128xf32>
    %147 = arith.addf %144, %146 : vector<2x128xf32>
    %c125_i32_58 = arith.constant 125 : i32
    %148 = tpu.dynamic_rotate %129 by %c125_i32_58 dim 1 : vector<2x128xf32>, i32 -> vector<2x128xf32>
    %149 = arith.mulf %74, %148 : vector<2x128xf32>
    %150 = arith.addf %147, %149 : vector<2x128xf32>
    %cst_59 = arith.constant dense<0.000000e+00> : vector<128xf32>
    %151 = vector.multi_reduction <add>, %150, %cst_59 [0] : vector<2x128xf32> to vector<128xf32>
    %152 = vector.shape_cast %151 : vector<128xf32> to vector<1x128xf32>
    %153 = vector.broadcast %75 : f32 to vector<1x128xf32>
    %154 = arith.addf %152, %153 : vector<1x128xf32>
    %155 = arith.negf %154 : vector<1x128xf32>
    %156 = math.exp %155 : vector<1x128xf32>
    %cst_60 = arith.constant 1.000000e+00 : f32
    %157 = vector.broadcast %cst_60 : f32 to vector<1x128xf32>
    %158 = arith.addf %157, %156 : vector<1x128xf32>
    %159 = arith.divf %157, %158 : vector<1x128xf32>
    %160 = vector.broadcast %159 : vector<1x128xf32> to vector<32x128xf32>
    %161 = arith.mulf %122, %160 : vector<32x128xf32>
    %162 = arith.addf %161, %79 : vector<32x128xf32>
    %c0_61 = arith.constant 0 : index
    %c0_62 = arith.constant 0 : index
    %c0_63 = arith.constant 0 : index
    %163 = vector.load %arg6[%c0_61, %c0_62, %c0_63] : memref<4x32x128xf32, #tpu.memory_space<vmem>>, vector<1x32x128xf32>
    %164 = vector.shape_cast %163 : vector<1x32x128xf32> to vector<32x128xf32>
    %165 = vector.shape_cast %162 : vector<32x128xf32> to vector<1x32x128xf32>
    tpu.vector_store %arg6[%c0_61, %c0_62, %c0_63], %165 {strides = array<i32>} : memref<4x32x128xf32, #tpu.memory_space<vmem>>, vector<1x32x128xf32>,
    %c1_64 = arith.constant 1 : index
    %c0_65 = arith.constant 0 : index
    %c0_66 = arith.constant 0 : index
    %166 = vector.load %arg1[%c1_64, %c0_65, %c0_66] : memref<4x32x128xf32, #tpu.memory_space<vmem>>, vector<1x32x128xf32>
    %167 = vector.shape_cast %166 : vector<1x32x128xf32> to vector<32x128xf32>
    %cst_67 = arith.constant dense<0xFF800000> : vector<32xf32>
    %168 = vector.multi_reduction <maximumf>, %167, %cst_67 [1] : vector<32x128xf32> to vector<32xf32>
    %169 = vector.shape_cast %168 : vector<32xf32> to vector<32x1xf32>
    %cst_68 = arith.constant dense<0.000000e+00> : vector<32xf32>
    %170 = vector.multi_reduction <add>, %167, %cst_68 [1] : vector<32x128xf32> to vector<32xf32>
    %171 = vector.shape_cast %170 : vector<32xf32> to vector<32x1xf32>
    %cst_69 = arith.constant 1.280000e+02 : f32
    %172 = vector.broadcast %cst_69 : f32 to vector<32x1xf32>
    %173 = arith.divf %171, %172 : vector<32x1xf32>
    %174 = tpu.concatenate %169, %173 in 1 : vector<32x1xf32>, vector<32x1xf32> -> vector<32x2xf32>
    %cst_70 = arith.constant 0.000000e+00 : f32
    %175 = vector.broadcast %cst_70 : f32 to vector<32x1xf32>
    %176 = vector.extract_strided_slice %76 {offsets = [0, 0], sizes = [32, 1], strides = [1, 1]} : vector<32x2xf32> to vector<32x1xf32>
    %177 = vector.broadcast %176 : vector<32x1xf32> to vector<32x2xf32>
    %178 = arith.mulf %177, %174 : vector<32x2xf32>
    %cst_71 = arith.constant dense<0.000000e+00> : vector<2xf32>
    %179 = vector.multi_reduction <add>, %178, %cst_71 [0] : vector<32x2xf32> to vector<2xf32>
    %180 = vector.shape_cast %179 : vector<2xf32> to vector<1x2xf32>
    %cst_72 = arith.constant 0.000000e+00 : f32
    %181 = vector.broadcast %cst_72 : f32 to vector<1x2xf32>
    %182 = arith.maximumf %180, %181 : vector<1x2xf32>
    %183 = vector.extract_strided_slice %77 {offsets = [0, 0], sizes = [32, 1], strides = [1, 1]} : vector<32x2xf32> to vector<32x1xf32>
    %184 = vector.extract_strided_slice %182 {offsets = [0, 0], sizes = [1, 1], strides = [1, 1]} : vector<1x2xf32> to vector<1x1xf32>
    %185 = vector.extract_strided_slice %182 {offsets = [0, 1], sizes = [1, 1], strides = [1, 1]} : vector<1x2xf32> to vector<1x1xf32>
    %186 = arith.addf %184, %185 : vector<1x1xf32>
    %187 = vector.broadcast %186 : vector<1x1xf32> to vector<32x1xf32>
    %188 = arith.mulf %183, %187 : vector<32x1xf32>
    %189 = arith.addf %175, %188 : vector<32x1xf32>
    %190 = vector.extract_strided_slice %76 {offsets = [0, 1], sizes = [32, 1], strides = [1, 1]} : vector<32x2xf32> to vector<32x1xf32>
    %191 = vector.broadcast %190 : vector<32x1xf32> to vector<32x2xf32>
    %192 = arith.mulf %191, %174 : vector<32x2xf32>
    %cst_73 = arith.constant dense<0.000000e+00> : vector<2xf32>
    %193 = vector.multi_reduction <add>, %192, %cst_73 [0] : vector<32x2xf32> to vector<2xf32>
    %194 = vector.shape_cast %193 : vector<2xf32> to vector<1x2xf32>
    %cst_74 = arith.constant 0.000000e+00 : f32
    %195 = vector.broadcast %cst_74 : f32 to vector<1x2xf32>
    %196 = arith.maximumf %194, %195 : vector<1x2xf32>
    %197 = vector.extract_strided_slice %77 {offsets = [0, 1], sizes = [32, 1], strides = [1, 1]} : vector<32x2xf32> to vector<32x1xf32>
    %198 = vector.extract_strided_slice %196 {offsets = [0, 0], sizes = [1, 1], strides = [1, 1]} : vector<1x2xf32> to vector<1x1xf32>
    %199 = vector.extract_strided_slice %196 {offsets = [0, 1], sizes = [1, 1], strides = [1, 1]} : vector<1x2xf32> to vector<1x1xf32>
    %200 = arith.addf %198, %199 : vector<1x1xf32>
    %201 = vector.broadcast %200 : vector<1x1xf32> to vector<32x1xf32>
    %202 = arith.mulf %197, %201 : vector<32x1xf32>
    %203 = arith.addf %189, %202 : vector<32x1xf32>
    %204 = arith.negf %203 : vector<32x1xf32>
    %205 = math.exp %204 : vector<32x1xf32>
    %cst_75 = arith.constant 1.000000e+00 : f32
    %206 = vector.broadcast %cst_75 : f32 to vector<32x1xf32>
    %207 = arith.addf %206, %205 : vector<32x1xf32>
    %208 = arith.divf %206, %207 : vector<32x1xf32>
    %209 = vector.broadcast %208 : vector<32x1xf32> to vector<32x128xf32>
    %210 = arith.mulf %167, %209 : vector<32x128xf32>
    %cst_76 = arith.constant dense<0xFF800000> : vector<128xf32>
    %211 = vector.multi_reduction <maximumf>, %210, %cst_76 [0] : vector<32x128xf32> to vector<128xf32>
    %212 = vector.shape_cast %211 : vector<128xf32> to vector<1x128xf32>
    %cst_77 = arith.constant dense<0.000000e+00> : vector<128xf32>
    %213 = vector.multi_reduction <add>, %210, %cst_77 [0] : vector<32x128xf32> to vector<128xf32>
    %214 = vector.shape_cast %213 : vector<128xf32> to vector<1x128xf32>
    %cst_78 = arith.constant 3.200000e+01 : f32
    %215 = vector.broadcast %cst_78 : f32 to vector<1x128xf32>
    %216 = arith.divf %214, %215 : vector<1x128xf32>
    %217 = tpu.concatenate %212, %216 in 0 : vector<1x128xf32>, vector<1x128xf32> -> vector<2x128xf32>
    %cst_79 = arith.constant 0.000000e+00 : f32
    %218 = vector.broadcast %cst_79 : f32 to vector<2x128xf32>
    %c3_i32_80 = arith.constant 3 : i32
    %219 = tpu.dynamic_rotate %217 by %c3_i32_80 dim 1 : vector<2x128xf32>, i32 -> vector<2x128xf32>
    %220 = arith.mulf %12, %219 : vector<2x128xf32>
    %221 = arith.addf %218, %220 : vector<2x128xf32>
    %c2_i32_81 = arith.constant 2 : i32
    %222 = tpu.dynamic_rotate %217 by %c2_i32_81 dim 1 : vector<2x128xf32>, i32 -> vector<2x128xf32>
    %223 = arith.mulf %23, %222 : vector<2x128xf32>
    %224 = arith.addf %221, %223 : vector<2x128xf32>
    %c1_i32_82 = arith.constant 1 : i32
    %225 = tpu.dynamic_rotate %217 by %c1_i32_82 dim 1 : vector<2x128xf32>, i32 -> vector<2x128xf32>
    %226 = arith.mulf %34, %225 : vector<2x128xf32>
    %227 = arith.addf %224, %226 : vector<2x128xf32>
    %228 = arith.mulf %41, %217 : vector<2x128xf32>
    %229 = arith.addf %227, %228 : vector<2x128xf32>
    %c127_i32_83 = arith.constant 127 : i32
    %230 = tpu.dynamic_rotate %217 by %c127_i32_83 dim 1 : vector<2x128xf32>, i32 -> vector<2x128xf32>
    %231 = arith.mulf %52, %230 : vector<2x128xf32>
    %232 = arith.addf %229, %231 : vector<2x128xf32>
    %c126_i32_84 = arith.constant 126 : i32
    %233 = tpu.dynamic_rotate %217 by %c126_i32_84 dim 1 : vector<2x128xf32>, i32 -> vector<2x128xf32>
    %234 = arith.mulf %63, %233 : vector<2x128xf32>
    %235 = arith.addf %232, %234 : vector<2x128xf32>
    %c125_i32_85 = arith.constant 125 : i32
    %236 = tpu.dynamic_rotate %217 by %c125_i32_85 dim 1 : vector<2x128xf32>, i32 -> vector<2x128xf32>
    %237 = arith.mulf %74, %236 : vector<2x128xf32>
    %238 = arith.addf %235, %237 : vector<2x128xf32>
    %cst_86 = arith.constant dense<0.000000e+00> : vector<128xf32>
    %239 = vector.multi_reduction <add>, %238, %cst_86 [0] : vector<2x128xf32> to vector<128xf32>
    %240 = vector.shape_cast %239 : vector<128xf32> to vector<1x128xf32>
    %241 = vector.broadcast %75 : f32 to vector<1x128xf32>
    %242 = arith.addf %240, %241 : vector<1x128xf32>
    %243 = arith.negf %242 : vector<1x128xf32>
    %244 = math.exp %243 : vector<1x128xf32>
    %cst_87 = arith.constant 1.000000e+00 : f32
    %245 = vector.broadcast %cst_87 : f32 to vector<1x128xf32>
    %246 = arith.addf %245, %244 : vector<1x128xf32>
    %247 = arith.divf %245, %246 : vector<1x128xf32>
    %248 = vector.broadcast %247 : vector<1x128xf32> to vector<32x128xf32>
    %249 = arith.mulf %210, %248 : vector<32x128xf32>
    %250 = arith.addf %249, %167 : vector<32x128xf32>
    %c1_88 = arith.constant 1 : index
    %c0_89 = arith.constant 0 : index
    %c0_90 = arith.constant 0 : index
    %251 = vector.load %arg6[%c1_88, %c0_89, %c0_90] : memref<4x32x128xf32, #tpu.memory_space<vmem>>, vector<1x32x128xf32>
    %252 = vector.shape_cast %251 : vector<1x32x128xf32> to vector<32x128xf32>
    %253 = vector.shape_cast %250 : vector<32x128xf32> to vector<1x32x128xf32>
    tpu.vector_store %arg6[%c1_88, %c0_89, %c0_90], %253 {strides = array<i32>} : memref<4x32x128xf32, #tpu.memory_space<vmem>>, vector<1x32x128xf32>,
    %c2_91 = arith.constant 2 : index
    %c0_92 = arith.constant 0 : index
    %c0_93 = arith.constant 0 : index
    %254 = vector.load %arg1[%c2_91, %c0_92, %c0_93] : memref<4x32x128xf32, #tpu.memory_space<vmem>>, vector<1x32x128xf32>
    %255 = vector.shape_cast %254 : vector<1x32x128xf32> to vector<32x128xf32>
    %cst_94 = arith.constant dense<0xFF800000> : vector<32xf32>
    %256 = vector.multi_reduction <maximumf>, %255, %cst_94 [1] : vector<32x128xf32> to vector<32xf32>
    %257 = vector.shape_cast %256 : vector<32xf32> to vector<32x1xf32>
    %cst_95 = arith.constant dense<0.000000e+00> : vector<32xf32>
    %258 = vector.multi_reduction <add>, %255, %cst_95 [1] : vector<32x128xf32> to vector<32xf32>
    %259 = vector.shape_cast %258 : vector<32xf32> to vector<32x1xf32>
    %cst_96 = arith.constant 1.280000e+02 : f32
    %260 = vector.broadcast %cst_96 : f32 to vector<32x1xf32>
    %261 = arith.divf %259, %260 : vector<32x1xf32>
    %262 = tpu.concatenate %257, %261 in 1 : vector<32x1xf32>, vector<32x1xf32> -> vector<32x2xf32>
    %cst_97 = arith.constant 0.000000e+00 : f32
    %263 = vector.broadcast %cst_97 : f32 to vector<32x1xf32>
    %264 = vector.extract_strided_slice %76 {offsets = [0, 0], sizes = [32, 1], strides = [1, 1]} : vector<32x2xf32> to vector<32x1xf32>
    %265 = vector.broadcast %264 : vector<32x1xf32> to vector<32x2xf32>
    %266 = arith.mulf %265, %262 : vector<32x2xf32>
    %cst_98 = arith.constant dense<0.000000e+00> : vector<2xf32>
    %267 = vector.multi_reduction <add>, %266, %cst_98 [0] : vector<32x2xf32> to vector<2xf32>
    %268 = vector.shape_cast %267 : vector<2xf32> to vector<1x2xf32>
    %cst_99 = arith.constant 0.000000e+00 : f32
    %269 = vector.broadcast %cst_99 : f32 to vector<1x2xf32>
    %270 = arith.maximumf %268, %269 : vector<1x2xf32>
    %271 = vector.extract_strided_slice %77 {offsets = [0, 0], sizes = [32, 1], strides = [1, 1]} : vector<32x2xf32> to vector<32x1xf32>
    %272 = vector.extract_strided_slice %270 {offsets = [0, 0], sizes = [1, 1], strides = [1, 1]} : vector<1x2xf32> to vector<1x1xf32>
    %273 = vector.extract_strided_slice %270 {offsets = [0, 1], sizes = [1, 1], strides = [1, 1]} : vector<1x2xf32> to vector<1x1xf32>
    %274 = arith.addf %272, %273 : vector<1x1xf32>
    %275 = vector.broadcast %274 : vector<1x1xf32> to vector<32x1xf32>
    %276 = arith.mulf %271, %275 : vector<32x1xf32>
    %277 = arith.addf %263, %276 : vector<32x1xf32>
    %278 = vector.extract_strided_slice %76 {offsets = [0, 1], sizes = [32, 1], strides = [1, 1]} : vector<32x2xf32> to vector<32x1xf32>
    %279 = vector.broadcast %278 : vector<32x1xf32> to vector<32x2xf32>
    %280 = arith.mulf %279, %262 : vector<32x2xf32>
    %cst_100 = arith.constant dense<0.000000e+00> : vector<2xf32>
    %281 = vector.multi_reduction <add>, %280, %cst_100 [0] : vector<32x2xf32> to vector<2xf32>
    %282 = vector.shape_cast %281 : vector<2xf32> to vector<1x2xf32>
    %cst_101 = arith.constant 0.000000e+00 : f32
    %283 = vector.broadcast %cst_101 : f32 to vector<1x2xf32>
    %284 = arith.maximumf %282, %283 : vector<1x2xf32>
    %285 = vector.extract_strided_slice %77 {offsets = [0, 1], sizes = [32, 1], strides = [1, 1]} : vector<32x2xf32> to vector<32x1xf32>
    %286 = vector.extract_strided_slice %284 {offsets = [0, 0], sizes = [1, 1], strides = [1, 1]} : vector<1x2xf32> to vector<1x1xf32>
    %287 = vector.extract_strided_slice %284 {offsets = [0, 1], sizes = [1, 1], strides = [1, 1]} : vector<1x2xf32> to vector<1x1xf32>
    %288 = arith.addf %286, %287 : vector<1x1xf32>
    %289 = vector.broadcast %288 : vector<1x1xf32> to vector<32x1xf32>
    %290 = arith.mulf %285, %289 : vector<32x1xf32>
    %291 = arith.addf %277, %290 : vector<32x1xf32>
    %292 = arith.negf %291 : vector<32x1xf32>
    %293 = math.exp %292 : vector<32x1xf32>
    %cst_102 = arith.constant 1.000000e+00 : f32
    %294 = vector.broadcast %cst_102 : f32 to vector<32x1xf32>
    %295 = arith.addf %294, %293 : vector<32x1xf32>
    %296 = arith.divf %294, %295 : vector<32x1xf32>
    %297 = vector.broadcast %296 : vector<32x1xf32> to vector<32x128xf32>
    %298 = arith.mulf %255, %297 : vector<32x128xf32>
    %cst_103 = arith.constant dense<0xFF800000> : vector<128xf32>
    %299 = vector.multi_reduction <maximumf>, %298, %cst_103 [0] : vector<32x128xf32> to vector<128xf32>
    %300 = vector.shape_cast %299 : vector<128xf32> to vector<1x128xf32>
    %cst_104 = arith.constant dense<0.000000e+00> : vector<128xf32>
    %301 = vector.multi_reduction <add>, %298, %cst_104 [0] : vector<32x128xf32> to vector<128xf32>
    %302 = vector.shape_cast %301 : vector<128xf32> to vector<1x128xf32>
    %cst_105 = arith.constant 3.200000e+01 : f32
    %303 = vector.broadcast %cst_105 : f32 to vector<1x128xf32>
    %304 = arith.divf %302, %303 : vector<1x128xf32>
    %305 = tpu.concatenate %300, %304 in 0 : vector<1x128xf32>, vector<1x128xf32> -> vector<2x128xf32>
    %cst_106 = arith.constant 0.000000e+00 : f32
    %306 = vector.broadcast %cst_106 : f32 to vector<2x128xf32>
    %c3_i32_107 = arith.constant 3 : i32
    %307 = tpu.dynamic_rotate %305 by %c3_i32_107 dim 1 : vector<2x128xf32>, i32 -> vector<2x128xf32>
    %308 = arith.mulf %12, %307 : vector<2x128xf32>
    %309 = arith.addf %306, %308 : vector<2x128xf32>
    %c2_i32_108 = arith.constant 2 : i32
    %310 = tpu.dynamic_rotate %305 by %c2_i32_108 dim 1 : vector<2x128xf32>, i32 -> vector<2x128xf32>
    %311 = arith.mulf %23, %310 : vector<2x128xf32>
    %312 = arith.addf %309, %311 : vector<2x128xf32>
    %c1_i32_109 = arith.constant 1 : i32
    %313 = tpu.dynamic_rotate %305 by %c1_i32_109 dim 1 : vector<2x128xf32>, i32 -> vector<2x128xf32>
    %314 = arith.mulf %34, %313 : vector<2x128xf32>
    %315 = arith.addf %312, %314 : vector<2x128xf32>
    %316 = arith.mulf %41, %305 : vector<2x128xf32>
    %317 = arith.addf %315, %316 : vector<2x128xf32>
    %c127_i32_110 = arith.constant 127 : i32
    %318 = tpu.dynamic_rotate %305 by %c127_i32_110 dim 1 : vector<2x128xf32>, i32 -> vector<2x128xf32>
    %319 = arith.mulf %52, %318 : vector<2x128xf32>
    %320 = arith.addf %317, %319 : vector<2x128xf32>
    %c126_i32_111 = arith.constant 126 : i32
    %321 = tpu.dynamic_rotate %305 by %c126_i32_111 dim 1 : vector<2x128xf32>, i32 -> vector<2x128xf32>
    %322 = arith.mulf %63, %321 : vector<2x128xf32>
    %323 = arith.addf %320, %322 : vector<2x128xf32>
    %c125_i32_112 = arith.constant 125 : i32
    %324 = tpu.dynamic_rotate %305 by %c125_i32_112 dim 1 : vector<2x128xf32>, i32 -> vector<2x128xf32>
    %325 = arith.mulf %74, %324 : vector<2x128xf32>
    %326 = arith.addf %323, %325 : vector<2x128xf32>
    %cst_113 = arith.constant dense<0.000000e+00> : vector<128xf32>
    %327 = vector.multi_reduction <add>, %326, %cst_113 [0] : vector<2x128xf32> to vector<128xf32>
    %328 = vector.shape_cast %327 : vector<128xf32> to vector<1x128xf32>
    %329 = vector.broadcast %75 : f32 to vector<1x128xf32>
    %330 = arith.addf %328, %329 : vector<1x128xf32>
    %331 = arith.negf %330 : vector<1x128xf32>
    %332 = math.exp %331 : vector<1x128xf32>
    %cst_114 = arith.constant 1.000000e+00 : f32
    %333 = vector.broadcast %cst_114 : f32 to vector<1x128xf32>
    %334 = arith.addf %333, %332 : vector<1x128xf32>
    %335 = arith.divf %333, %334 : vector<1x128xf32>
    %336 = vector.broadcast %335 : vector<1x128xf32> to vector<32x128xf32>
    %337 = arith.mulf %298, %336 : vector<32x128xf32>
    %338 = arith.addf %337, %255 : vector<32x128xf32>
    %c2_115 = arith.constant 2 : index
    %c0_116 = arith.constant 0 : index
    %c0_117 = arith.constant 0 : index
    %339 = vector.load %arg6[%c2_115, %c0_116, %c0_117] : memref<4x32x128xf32, #tpu.memory_space<vmem>>, vector<1x32x128xf32>
    %340 = vector.shape_cast %339 : vector<1x32x128xf32> to vector<32x128xf32>
    %341 = vector.shape_cast %338 : vector<32x128xf32> to vector<1x32x128xf32>
    tpu.vector_store %arg6[%c2_115, %c0_116, %c0_117], %341 {strides = array<i32>} : memref<4x32x128xf32, #tpu.memory_space<vmem>>, vector<1x32x128xf32>,
    %c3_118 = arith.constant 3 : index
    %c0_119 = arith.constant 0 : index
    %c0_120 = arith.constant 0 : index
    %342 = vector.load %arg1[%c3_118, %c0_119, %c0_120] : memref<4x32x128xf32, #tpu.memory_space<vmem>>, vector<1x32x128xf32>
    %343 = vector.shape_cast %342 : vector<1x32x128xf32> to vector<32x128xf32>
    %cst_121 = arith.constant dense<0xFF800000> : vector<32xf32>
    %344 = vector.multi_reduction <maximumf>, %343, %cst_121 [1] : vector<32x128xf32> to vector<32xf32>
    %345 = vector.shape_cast %344 : vector<32xf32> to vector<32x1xf32>
    %cst_122 = arith.constant dense<0.000000e+00> : vector<32xf32>
    %346 = vector.multi_reduction <add>, %343, %cst_122 [1] : vector<32x128xf32> to vector<32xf32>
    %347 = vector.shape_cast %346 : vector<32xf32> to vector<32x1xf32>
    %cst_123 = arith.constant 1.280000e+02 : f32
    %348 = vector.broadcast %cst_123 : f32 to vector<32x1xf32>
    %349 = arith.divf %347, %348 : vector<32x1xf32>
    %350 = tpu.concatenate %345, %349 in 1 : vector<32x1xf32>, vector<32x1xf32> -> vector<32x2xf32>
    %cst_124 = arith.constant 0.000000e+00 : f32
    %351 = vector.broadcast %cst_124 : f32 to vector<32x1xf32>
    %352 = vector.extract_strided_slice %76 {offsets = [0, 0], sizes = [32, 1], strides = [1, 1]} : vector<32x2xf32> to vector<32x1xf32>
    %353 = vector.broadcast %352 : vector<32x1xf32> to vector<32x2xf32>
    %354 = arith.mulf %353, %350 : vector<32x2xf32>
    %cst_125 = arith.constant dense<0.000000e+00> : vector<2xf32>
    %355 = vector.multi_reduction <add>, %354, %cst_125 [0] : vector<32x2xf32> to vector<2xf32>
    %356 = vector.shape_cast %355 : vector<2xf32> to vector<1x2xf32>
    %cst_126 = arith.constant 0.000000e+00 : f32
    %357 = vector.broadcast %cst_126 : f32 to vector<1x2xf32>
    %358 = arith.maximumf %356, %357 : vector<1x2xf32>
    %359 = vector.extract_strided_slice %77 {offsets = [0, 0], sizes = [32, 1], strides = [1, 1]} : vector<32x2xf32> to vector<32x1xf32>
    %360 = vector.extract_strided_slice %358 {offsets = [0, 0], sizes = [1, 1], strides = [1, 1]} : vector<1x2xf32> to vector<1x1xf32>
    %361 = vector.extract_strided_slice %358 {offsets = [0, 1], sizes = [1, 1], strides = [1, 1]} : vector<1x2xf32> to vector<1x1xf32>
    %362 = arith.addf %360, %361 : vector<1x1xf32>
    %363 = vector.broadcast %362 : vector<1x1xf32> to vector<32x1xf32>
    %364 = arith.mulf %359, %363 : vector<32x1xf32>
    %365 = arith.addf %351, %364 : vector<32x1xf32>
    %366 = vector.extract_strided_slice %76 {offsets = [0, 1], sizes = [32, 1], strides = [1, 1]} : vector<32x2xf32> to vector<32x1xf32>
    %367 = vector.broadcast %366 : vector<32x1xf32> to vector<32x2xf32>
    %368 = arith.mulf %367, %350 : vector<32x2xf32>
    %cst_127 = arith.constant dense<0.000000e+00> : vector<2xf32>
    %369 = vector.multi_reduction <add>, %368, %cst_127 [0] : vector<32x2xf32> to vector<2xf32>
    %370 = vector.shape_cast %369 : vector<2xf32> to vector<1x2xf32>
    %cst_128 = arith.constant 0.000000e+00 : f32
    %371 = vector.broadcast %cst_128 : f32 to vector<1x2xf32>
    %372 = arith.maximumf %370, %371 : vector<1x2xf32>
    %373 = vector.extract_strided_slice %77 {offsets = [0, 1], sizes = [32, 1], strides = [1, 1]} : vector<32x2xf32> to vector<32x1xf32>
    %374 = vector.extract_strided_slice %372 {offsets = [0, 0], sizes = [1, 1], strides = [1, 1]} : vector<1x2xf32> to vector<1x1xf32>
    %375 = vector.extract_strided_slice %372 {offsets = [0, 1], sizes = [1, 1], strides = [1, 1]} : vector<1x2xf32> to vector<1x1xf32>
    %376 = arith.addf %374, %375 : vector<1x1xf32>
    %377 = vector.broadcast %376 : vector<1x1xf32> to vector<32x1xf32>
    %378 = arith.mulf %373, %377 : vector<32x1xf32>
    %379 = arith.addf %365, %378 : vector<32x1xf32>
    %380 = arith.negf %379 : vector<32x1xf32>
    %381 = math.exp %380 : vector<32x1xf32>
    %cst_129 = arith.constant 1.000000e+00 : f32
    %382 = vector.broadcast %cst_129 : f32 to vector<32x1xf32>
    %383 = arith.addf %382, %381 : vector<32x1xf32>
    %384 = arith.divf %382, %383 : vector<32x1xf32>
    %385 = vector.broadcast %384 : vector<32x1xf32> to vector<32x128xf32>
    %386 = arith.mulf %343, %385 : vector<32x128xf32>
    %cst_130 = arith.constant dense<0xFF800000> : vector<128xf32>
    %387 = vector.multi_reduction <maximumf>, %386, %cst_130 [0] : vector<32x128xf32> to vector<128xf32>
    %388 = vector.shape_cast %387 : vector<128xf32> to vector<1x128xf32>
    %cst_131 = arith.constant dense<0.000000e+00> : vector<128xf32>
    %389 = vector.multi_reduction <add>, %386, %cst_131 [0] : vector<32x128xf32> to vector<128xf32>
    %390 = vector.shape_cast %389 : vector<128xf32> to vector<1x128xf32>
    %cst_132 = arith.constant 3.200000e+01 : f32
    %391 = vector.broadcast %cst_132 : f32 to vector<1x128xf32>
    %392 = arith.divf %390, %391 : vector<1x128xf32>
    %393 = tpu.concatenate %388, %392 in 0 : vector<1x128xf32>, vector<1x128xf32> -> vector<2x128xf32>
    %cst_133 = arith.constant 0.000000e+00 : f32
    %394 = vector.broadcast %cst_133 : f32 to vector<2x128xf32>
    %c3_i32_134 = arith.constant 3 : i32
    %395 = tpu.dynamic_rotate %393 by %c3_i32_134 dim 1 : vector<2x128xf32>, i32 -> vector<2x128xf32>
    %396 = arith.mulf %12, %395 : vector<2x128xf32>
    %397 = arith.addf %394, %396 : vector<2x128xf32>
    %c2_i32_135 = arith.constant 2 : i32
    %398 = tpu.dynamic_rotate %393 by %c2_i32_135 dim 1 : vector<2x128xf32>, i32 -> vector<2x128xf32>
    %399 = arith.mulf %23, %398 : vector<2x128xf32>
    %400 = arith.addf %397, %399 : vector<2x128xf32>
    %c1_i32_136 = arith.constant 1 : i32
    %401 = tpu.dynamic_rotate %393 by %c1_i32_136 dim 1 : vector<2x128xf32>, i32 -> vector<2x128xf32>
    %402 = arith.mulf %34, %401 : vector<2x128xf32>
    %403 = arith.addf %400, %402 : vector<2x128xf32>
    %404 = arith.mulf %41, %393 : vector<2x128xf32>
    %405 = arith.addf %403, %404 : vector<2x128xf32>
    %c127_i32_137 = arith.constant 127 : i32
    %406 = tpu.dynamic_rotate %393 by %c127_i32_137 dim 1 : vector<2x128xf32>, i32 -> vector<2x128xf32>
    %407 = arith.mulf %52, %406 : vector<2x128xf32>
    %408 = arith.addf %405, %407 : vector<2x128xf32>
    %c126_i32_138 = arith.constant 126 : i32
    %409 = tpu.dynamic_rotate %393 by %c126_i32_138 dim 1 : vector<2x128xf32>, i32 -> vector<2x128xf32>
    %410 = arith.mulf %63, %409 : vector<2x128xf32>
    %411 = arith.addf %408, %410 : vector<2x128xf32>
    %c125_i32_139 = arith.constant 125 : i32
    %412 = tpu.dynamic_rotate %393 by %c125_i32_139 dim 1 : vector<2x128xf32>, i32 -> vector<2x128xf32>
    %413 = arith.mulf %74, %412 : vector<2x128xf32>
    %414 = arith.addf %411, %413 : vector<2x128xf32>
    %cst_140 = arith.constant dense<0.000000e+00> : vector<128xf32>
    %415 = vector.multi_reduction <add>, %414, %cst_140 [0] : vector<2x128xf32> to vector<128xf32>
    %416 = vector.shape_cast %415 : vector<128xf32> to vector<1x128xf32>
    %417 = vector.broadcast %75 : f32 to vector<1x128xf32>
    %418 = arith.addf %416, %417 : vector<1x128xf32>
    %419 = arith.negf %418 : vector<1x128xf32>
    %420 = math.exp %419 : vector<1x128xf32>
    %cst_141 = arith.constant 1.000000e+00 : f32
    %421 = vector.broadcast %cst_141 : f32 to vector<1x128xf32>
    %422 = arith.addf %421, %420 : vector<1x128xf32>
    %423 = arith.divf %421, %422 : vector<1x128xf32>
    %424 = vector.broadcast %423 : vector<1x128xf32> to vector<32x128xf32>
    %425 = arith.mulf %386, %424 : vector<32x128xf32>
    %426 = arith.addf %425, %343 : vector<32x128xf32>
    %c3_142 = arith.constant 3 : index
    %c0_143 = arith.constant 0 : index
    %c0_144 = arith.constant 0 : index
    %427 = vector.load %arg6[%c3_142, %c0_143, %c0_144] : memref<4x32x128xf32, #tpu.memory_space<vmem>>, vector<1x32x128xf32>
    %428 = vector.shape_cast %427 : vector<1x32x128xf32> to vector<32x128xf32>
    %429 = vector.shape_cast %426 : vector<32x128xf32> to vector<1x32x128xf32>
    tpu.vector_store %arg6[%c3_142, %c0_143, %c0_144], %429 {strides = array<i32>} : memref<4x32x128xf32, #tpu.memory_space<vmem>>, vector<1x32x128xf32>,
    return
  }
  func.func @transform_0(%arg0: i32) -> (i32, i32, i32) {
    %c0_i32 = arith.constant 0 : i32
    %c0_i32_0 = arith.constant 0 : i32
    %c0_i32_1 = arith.constant 0 : i32
    return %arg0, %c0_i32, %c0_i32_0 : i32, i32, i32
  }
  func.func @transform_1(%arg0: i32) -> (i32, i32) {
    %c0_i32 = arith.constant 0 : i32
    %c0_i32_0 = arith.constant 0 : i32
    %c0_i32_1 = arith.constant 0 : i32
    return %c0_i32, %c0_i32_0 : i32, i32
  }
  func.func @transform_2(%arg0: i32) -> (i32, i32) {
    %c0_i32 = arith.constant 0 : i32
    %c0_i32_0 = arith.constant 0 : i32
    %c0_i32_1 = arith.constant 0 : i32
    return %c0_i32, %c0_i32_0 : i32, i32
  }
  func.func @transform_3(%arg0: i32) -> (i32, i32) {
    %c0_i32 = arith.constant 0 : i32
    %c0_i32_0 = arith.constant 0 : i32
    %c0_i32_1 = arith.constant 0 : i32
    return %c0_i32, %c0_i32_0 : i32, i32
  }
  func.func @transform_4(%arg0: i32) -> i32 {
    %c0_i32 = arith.constant 0 : i32
    %c0_i32_0 = arith.constant 0 : i32
    return %c0_i32 : i32
  }
  func.func @transform_5(%arg0: i32) -> (i32, i32, i32) {
    %c0_i32 = arith.constant 0 : i32
    %c0_i32_0 = arith.constant 0 : i32
    %c0_i32_1 = arith.constant 0 : i32
    return %arg0, %c0_i32, %c0_i32_0 : i32, i32, i32
  }
}

</mosaic_0001>

<llo_original>
// kernel: tpu_custom_call.1
$region0: #{tpu_custom_call.1}
  #allocation0 [shape = 'u32[]', space=smem, size = 0x4, offset = 0x4, fixed_abs, tag = 'smem constant byte address 0x4 - core index']
  #allocation1 [shape = 'u32[144,128]{1,0:T(1,128)}', space=vmem, size = 0x12000, scoped, tag = 'internal scratch']
  #allocation2 [shape = 'f32[1]{0:T(128)S(6)}', space=smem, size = 0x200, scoped, tag = 'scoped memory for tpu_custom_call.1']
  %s0 = inlined_call_operand.hbm [shape: f32[8,32,128], index: 0, kind: input, shape index: {}]
  %s1 = inlined_call_operand.hbm [shape: f32[32,2], index: 1, kind: input, shape index: {}]
  %s2 = inlined_call_operand.hbm [shape: f32[32,2], index: 2, kind: input, shape index: {}]
  %s3 = inlined_call_operand.hbm [shape: f32[2,7], index: 3, kind: input, shape index: {}]
  %s4 = inlined_call_operand.<no memory space> [shape: f32[1], index: 4, kind: input, shape index: {}]
  %s5 = inlined_call_operand.hbm [shape: f32[8,32,128], index: 5, kind: output, shape index: {}]
  %s6 = sld [smem:[#allocation0]]
  $region69: #{tpu_custom_call.1} parent=0
    _
  %s8 = ssub.s32 1, %s6
  %s9 = scalar_select 0, %s8, %s6
  %10 = sst [smem:[#allocation2]] %s4
  $region1: #{tpu_custom_call.1} parent=0
    #allocation3 [shape = 'u8[131072]{0}', space=vmem, size = 0x20000, scoped, tag = 'input window, operand 0']
    #allocation4 [shape = 's32[2]{0}', space=sflag, size = 0x8, scoped, tag = 'scoped memory for tpu_custom_call.1']
    #allocation5 [shape = 's32[2]{0}', space=sflag, size = 0x8, scoped, tag = 'scoped memory for tpu_custom_call.1']
    #allocation6 [shape = 's32[2]{0}', space=sflag, size = 0x8, scoped, tag = 'scoped memory for tpu_custom_call.1']
    #allocation7 [shape = 'u8[16384]{0}', space=vmem, size = 0x4000, scoped, tag = 'input window, operand 1, single buffered']
    #allocation8 [shape = 's32[1]{0}', space=sflag, size = 0x4, scoped, tag = 'scoped memory for tpu_custom_call.1']
    #allocation9 [shape = 'u8[16384]{0}', space=vmem, size = 0x4000, scoped, tag = 'input window, operand 2, single buffered']
    #allocation10 [shape = 'u8[1024]{0}', space=smem, size = 0x400, scoped, tag = 'input window, operand 3, single buffered']
    #allocation11 [shape = 'u8[131072]{0}', space=vmem, size = 0x20000, scoped, tag = 'output window, operand 0']
    %11 = vsyncpa [#allocation4], 0
    %s12 = scalar_lea.sflag [#allocation4], 1
    %13 = vsyncpa %s12, 0
    %14 = vsyncpa [#allocation8], 0
    %15 = vsyncpa [#allocation6], 0
    %16 = vsyncpa [#allocation5], 0
    %s17 = scalar_lea.sflag [#allocation5], 1
    %18 = vsyncpa %s17, 0
    loop: start=0, step=1, limit=4
    $region2: #{tpu_custom_call.1} parent=1 // loop_pre_header
      _
    $region3: #{tpu_custom_call.1} parent=1 // loop_header
      %s20 = sphi 0, %s24
      %p21 = scmp.ge.s32.totalorder %s20, 4
      %s30 = sphi 0, %s32
      %s33 = sphi 0, %s30
      %s34 = sphi 0, %s33
      %s50 = sphi 0, %s34
      %s54 = sphi 0, %s54
      %s56 = sphi 0, %s54
      %s57 = sphi 0, %s56
      %s71 = sphi 0, %s57
      %s75 = sphi 0, %s75
      %s77 = sphi 0, %s75
      %s78 = sphi 0, %s77
      %s92 = sphi 0, %s78
      %s96 = sphi 0, %s96
      %s98 = sphi 0, %s96
      %s99 = sphi 0, %s98
      %s113 = sphi 0, %s99
      %s117 = sphi 0, %s117
      %s119 = sphi 0, %s117
      %s120 = sphi 0, %s119
      %s134 = sphi 0, %s120
      %s140 = sphi 0, %s142
      %s143 = sphi 0, %s140
      %s144 = sphi 0, %s143
      %s160 = sphi 0, %s144
    $region4: #{tpu_custom_call.1} parent=1 // loop_header_branch
      %23 = sbr.rel (%p21) target = $region8
    $region5: #{tpu_custom_call.1} parent=1 // loop_body
      %s25 = ssub.s32 %s20, 1
      %s26 = ssub.s32 %s20, 2
      %s27 = sadd.s32 %s20, 1
      %s28 = ssub.s32 %s20, %s27
      %p29 = scmp.eq.s32.totalorder %s28, 0
      %s31 = sadd.s32 %s30, 1
      %s32 = scalar_select %p29, %s30, %s31
      %p35 = pneg %p29
      %p36 = scmp.eq.s32.totalorder %s20, 1
      %p37 = por %p35, %p36
      %p38 = scmp.ne.s32.totalorder %s30, %s33
      %p39 = scmp.eq.s32.totalorder %s20, 0
      %p40 = por %p38, %p39
      %p41 = scmp.ne.s32.totalorder %s30, %s33
      %p42 = scmp.eq.s32.totalorder %s25, 1
      %p43 = por %p41, %p42
      %p44 = scmp.ne.s32.totalorder %s33, %s34
      %p45 = scmp.eq.s32.totalorder %s25, 0
      %p46 = por %p44, %p45
      %p47 = scmp.ne.s32.totalorder %s33, %s34
      %p48 = scmp.eq.s32.totalorder %s26, 1
      %p49 = por %p47, %p48
      %p51 = scmp.ne.s32.totalorder %s34, %s50
      %p52 = scmp.eq.s32.totalorder %s26, 0
      %p53 = por %p51, %p52
      %s55 = sadd.s32 %s54, 1
      %p58 = scmp.eq.s32.totalorder %s20, 1
      %p59 = scmp.ne.s32.totalorder %s54, %s56
      %p60 = scmp.eq.s32.totalorder %s20, 0
      %p61 = por %p59, %p60
      %p62 = scmp.ne.s32.totalorder %s54, %s56
      %p63 = scmp.eq.s32.totalorder %s25, 1
      %p64 = por %p62, %p63
      %p65 = scmp.ne.s32.totalorder %s56, %s57
      %p66 = scmp.eq.s32.totalorder %s25, 0
      %p67 = por %p65, %p66
      %p68 = scmp.ne.s32.totalorder %s56, %s57
      %p69 = scmp.eq.s32.totalorder %s26, 1
      %p70 = por %p68, %p69
      %p72 = scmp.ne.s32.totalorder %s57, %s71
      %p73 = scmp.eq.s32.totalorder %s26, 0
      %p74 = por %p72, %p73
      %s76 = sadd.s32 %s75, 1
      %p79 = scmp.eq.s32.totalorder %s20, 1
      %p80 = scmp.ne.s32.totalorder %s75, %s77
      %p81 = scmp.eq.s32.totalorder %s20, 0
      %p82 = por %p80, %p81
      %p83 = scmp.ne.s32.totalorder %s75, %s77
      %p84 = scmp.eq.s32.totalorder %s25, 1
      %p85 = por %p83, %p84
      %p86 = scmp.ne.s32.totalorder %s77, %s78
      %p87 = scmp.eq.s32.totalorder %s25, 0
      %p88 = por %p86, %p87
      %p89 = scmp.ne.s32.totalorder %s77, %s78
      %p90 = scmp.eq.s32.totalorder %s26, 1
      %p91 = por %p89, %p90
      %p93 = scmp.ne.s32.totalorder %s78, %s92
      %p94 = scmp.eq.s32.totalorder %s26, 0
      %p95 = por %p93, %p94
      %s97 = sadd.s32 %s96, 1
      %p100 = scmp.eq.s32.totalorder %s20, 1
      %p101 = scmp.ne.s32.totalorder %s96, %s98
      %p102 = scmp.eq.s32.totalorder %s20, 0
      %p103 = por %p101, %p102
      %p104 = scmp.ne.s32.totalorder %s96, %s98
      %p105 = scmp.eq.s32.totalorder %s25, 1
      %p106 = por %p104, %p105
      %p107 = scmp.ne.s32.totalorder %s98, %s99
      %p108 = scmp.eq.s32.totalorder %s25, 0
      %p109 = por %p107, %p108
      %p110 = scmp.ne.s32.totalorder %s98, %s99
      %p111 = scmp.eq.s32.totalorder %s26, 1
      %p112 = por %p110, %p111
      %p114 = scmp.ne.s32.totalorder %s99, %s113
      %p115 = scmp.eq.s32.totalorder %s26, 0
      %p116 = por %p114, %p115
      %s118 = sadd.s32 %s117, 1
      %p121 = scmp.eq.s32.totalorder %s20, 1
      %p122 = scmp.ne.s32.totalorder %s117, %s119
      %p123 = scmp.eq.s32.totalorder %s20, 0
      %p124 = por %p122, %p123
      %p125 = scmp.ne.s32.totalorder %s117, %s119
      %p126 = scmp.eq.s32.totalorder %s25, 1
      %p127 = por %p125, %p126
      %p128 = scmp.ne.s32.totalorder %s119, %s120
      %p129 = scmp.eq.s32.totalorder %s25, 0
      %p130 = por %p128, %p129
      %p131 = scmp.ne.s32.totalorder %s119, %s120
      %p132 = scmp.eq.s32.totalorder %s26, 1
      %p133 = por %p131, %p132
      %p135 = scmp.ne.s32.totalorder %s120, %s134
      %p136 = scmp.eq.s32.totalorder %s26, 0
      %p137 = por %p135, %p136
      %s138 = ssub.s32 %s20, %s27
      %p139 = scmp.eq.s32.totalorder %s138, 0
      %s141 = sadd.s32 %s140, 1
      %s142 = scalar_select %p139, %s140, %s141
      %p145 = pneg %p139
      %p146 = scmp.eq.s32.totalorder %s20, 1
      %p147 = por %p145, %p146
      %p148 = scmp.ne.s32.totalorder %s140, %s143
      %p149 = scmp.eq.s32.totalorder %s20, 0
      %p150 = por %p148, %p149
      %p151 = scmp.ne.s32.totalorder %s140, %s143
      %p152 = scmp.eq.s32.totalorder %s25, 1
      %p153 = por %p151, %p152
      %p154 = scmp.ne.s32.totalorder %s143, %s144
      %p155 = scmp.eq.s32.totalorder %s25, 0
      %p156 = por %p154, %p155
      %p157 = scmp.ne.s32.totalorder %s143, %s144
      %p158 = scmp.eq.s32.totalorder %s26, 1
      %p159 = por %p157, %p158
      %p161 = scmp.ne.s32.totalorder %s144, %s160
      %p162 = scmp.eq.s32.totalorder %s26, 0
      %p163 = por %p161, %p162
      %p164 = scmp.le.s32.totalorder 1, %s20
      %p165 = scmp.lt.s32.totalorder %s20, 3
      %p166 = pnand %p164, %p165
      %p167 = pneg %p166
      // Predicated region
      $region9: #{tpu_custom_call.1} parent=5 // pred_check
        _
      $region10: #{tpu_custom_call.1} parent=5 // pred_check_branch
        %169 = sbr.rel (%p166) target = $region12
      $region11: #{tpu_custom_call.1} parent=5 // pred_region
        %s170 = ssub.s32 %s20, 1
        // Predicated region
        $region13: #{tpu_custom_call.1} parent=11 // pred_check
          %p171 = pneg %p67
        $region14: #{tpu_custom_call.1} parent=11 // pred_check_branch
          %173 = sbr.rel (%p171) target = $region16
        $region15: #{tpu_custom_call.1} parent=11 // pred_region
          %s175 = ssub.s32 512, 512
          %176 = vsyncadd [#allocation8], %s175
          %s177 = sshll.u32 [#allocation7], 4
          %s178 = int_to_ptr.vmem [resolvable:$true] %s177
          %183 = dma.hbm_to_vmem [thread:$0]  %s1, 512, %s178, [#allocation8], 128, 128, 8
        $region16: #{tpu_custom_call.1} parent=11 // pred_fallthru
          _
        // Predicated region
        $region17: #{tpu_custom_call.1} parent=11 // pred_check
          %p184 = pneg %p88
        $region18: #{tpu_custom_call.1} parent=11 // pred_check_branch
          %186 = sbr.rel (%p184) target = $region20
        $region19: #{tpu_custom_call.1} parent=11 // pred_region
          %s188 = ssub.s32 512, 512
          %189 = vsyncadd [#allocation8], %s188
          %s190 = sshll.u32 [#allocation9], 4
          %s191 = int_to_ptr.vmem [resolvable:$true] %s190
          %196 = dma.hbm_to_vmem [thread:$0]  %s2, 512, %s191, [#allocation8], 128, 128, 8
        $region20: #{tpu_custom_call.1} parent=11 // pred_fallthru
          _
        // Predicated region
        $region21: #{tpu_custom_call.1} parent=11 // pred_check
          %p197 = pneg %p109
        $region22: #{tpu_custom_call.1} parent=11 // pred_check_branch
          %199 = sbr.rel (%p197) target = $region24
        $region23: #{tpu_custom_call.1} parent=11 // pred_region
          %s201 = ssub.s32 32, 32
          %202 = vsyncadd [#allocation6], %s201
          %205 = dma.hbm_to_smem %s3, 32, [#allocation10], [#allocation6]
        $region24: #{tpu_custom_call.1} parent=11 // pred_fallthru
          _
        // Predicated region
        $region25: #{tpu_custom_call.1} parent=11 // pred_check
          %p206 = pneg %p130
        $region26: #{tpu_custom_call.1} parent=11 // pred_check_branch
          %208 = sbr.rel (%p206) target = $region28
        $region27: #{tpu_custom_call.1} parent=11 // pred_region
          _
        $region28: #{tpu_custom_call.1} parent=11 // pred_fallthru
          _
      $region12: #{tpu_custom_call.1} parent=5 // pred_fallthru
        _
      %p209 = scmp.lt.s32.totalorder %s20, 2
      // Predicated region
      $region29: #{tpu_custom_call.1} parent=5 // pred_check
        %p210 = pneg %p209
      $region30: #{tpu_custom_call.1} parent=5 // pred_check_branch
        %212 = sbr.rel (%p210) target = $region32
      $region31: #{tpu_custom_call.1} parent=5 // pred_region
        // Predicated region
        $region33: #{tpu_custom_call.1} parent=31 // pred_check
          %p213 = pneg %p40
        $region34: #{tpu_custom_call.1} parent=31 // pred_check_branch
          %215 = sbr.rel (%p213) target = $region36
        $region35: #{tpu_custom_call.1} parent=31 // pred_region
          %s216 = sand.u32 %s30, 1
          %s217 = scalar_lea.sflag [#allocation4], %s216
          %s218 = sand.u32 %s30, 1
          %s219 = smul.addr %s218, 128
          %s220 = scalar_lea.vmem [#allocation3], %s219
          %s221 = smul.u32 4, %s20
          %s223 = ssub.s32 2048, 2048
          %224 = vsyncadd %s217, %s223
          %s225 = smul.addr %s221, 4
          %s226 = smul.addr %s225, 128
          %s227 = scalar_lea.hbm %s0, %s226
          %s228 = sshll.u32 %s220, 4
          %s229 = int_to_ptr.vmem [resolvable:$true] %s228
          %234 = dma.hbm_to_vmem [thread:$0]  %s227, 2048, %s229, %s217, 128, 128, 8
        $region36: #{tpu_custom_call.1} parent=31 // pred_fallthru
          _
      $region32: #{tpu_custom_call.1} parent=5 // pred_fallthru
        _
      %p235 = scmp.le.s32.totalorder 1, %s20
      %p236 = scmp.lt.s32.totalorder %s20, 3
      %p237 = pnand %p235, %p236
      %p238 = pneg %p237
      // Predicated region
      $region37: #{tpu_custom_call.1} parent=5 // pred_check
        _
      $region38: #{tpu_custom_call.1} parent=5 // pred_check_branch
        %240 = sbr.rel (%p237) target = $region40
      $region39: #{tpu_custom_call.1} parent=5 // pred_region
        %s241 = ssub.s32 %s20, 1
        %s242 = sand.u32 %s33, 1
        %s243 = scalar_lea.sflag [#allocation4], %s242
        %s244 = sand.u32 %s33, 1
        %s245 = smul.addr %s244, 128
        %s246 = scalar_lea.vmem [#allocation3], %s245
        // Predicated region
        $region41: #{tpu_custom_call.1} parent=39 // pred_check
          %p247 = pneg %p46
        $region42: #{tpu_custom_call.1} parent=39 // pred_check_branch
          %249 = sbr.rel (%p247) target = $region44
        $region43: #{tpu_custom_call.1} parent=39 // pred_region
          %250 = dma.done %s243, 2048
        $region44: #{tpu_custom_call.1} parent=39 // pred_fallthru
          _
        // Predicated region
        $region45: #{tpu_custom_call.1} parent=39 // pred_check
          %p251 = pneg %p67
        $region46: #{tpu_custom_call.1} parent=39 // pred_check_branch
          %253 = sbr.rel (%p251) target = $region48
        $region47: #{tpu_custom_call.1} parent=39 // pred_region
          %254 = dma.done [#allocation8], 512
        $region48: #{tpu_custom_call.1} parent=39 // pred_fallthru
          _
        // Predicated region
        $region49: #{tpu_custom_call.1} parent=39 // pred_check
          %p255 = pneg %p88
        $region50: #{tpu_custom_call.1} parent=39 // pred_check_branch
          %257 = sbr.rel (%p255) target = $region52
        $region51: #{tpu_custom_call.1} parent=39 // pred_region
          %258 = dma.done [#allocation8], 512
        $region52: #{tpu_custom_call.1} parent=39 // pred_fallthru
          _
        // Predicated region
        $region53: #{tpu_custom_call.1} parent=39 // pred_check
          %p259 = pneg %p109
        $region54: #{tpu_custom_call.1} parent=39 // pred_check_branch
          %261 = sbr.rel (%p259) target = $region56
        $region55: #{tpu_custom_call.1} parent=39 // pred_region
          %262 = dma.done [#allocation6], 32
        $region56: #{tpu_custom_call.1} parent=39 // pred_fallthru
          _
        %263 = sfence
        %s264 = sand.u32 %s33, 1
        %s265 = scalar_lea.sflag [#allocation4], %s264
        %s266 = sand.u32 %s33, 1
        %s267 = smul.addr %s266, 128
        %s268 = scalar_lea.vmem [#allocation3], %s267
        %p269 = pneg %p46
        %p270 = pneg %p43
        %p271 = pneg %p67
        %p272 = pneg %p64
        %p273 = pneg %p88
        %p274 = pneg %p85
        %p275 = pneg %p109
        %p276 = pneg %p106
        %p277 = pneg %p130
        %p278 = pneg %p127
        %p279 = pneg %p156
        %p280 = pneg %p153
        %s281 = sand.u32 %s143, 1
        %s282 = scalar_lea.sflag [#allocation5], %s281
        %s283 = sand.u32 %s143, 1
        %s284 = smul.addr %s283, 128
        %s285 = scalar_lea.vmem [#allocation11], %s284
        %s286 = smul.u32 4, %s25
        %s287 = smul.u32 4, %s25
        %v288 = vlaneseq
        %v289 = vand.u32 %v288, 127
        %v290 = vlaneseq
        %v291 = vshrl.u32 %v290, 7
        %vm292 = vcmp.eq.s32.totalorder %v291, 0
        %s293 = sld [smem:[#allocation10]]
        %s294 = sld [smem:[#allocation10 + $0x80]]
        %v295 = vstv %s293
        %v296 = vstv %s294
        %v297 = vsel %vm292, %v295, %v296
        %vm298 = vcmp.ge.s32.totalorder %v289, 3
        %v299 = vsel %vm298, %v297, 0.0
        %s300 = sld [smem:[#allocation10 + $0x1]]
        %s301 = sld [smem:[#allocation10 + $0x81]]
        %v302 = vstv %s300
        %v303 = vstv %s301
        %v304 = vsel %vm292, %v302, %v303
        %vm305 = vcmp.ge.s32.totalorder %v289, 2
        %v306 = vsel %vm305, %v304, 0.0
        %s307 = sld [smem:[#allocation10 + $0x2]]
        %s308 = sld [smem:[#allocation10 + $0x82]]
        %v309 = vstv %s307
        %v310 = vstv %s308
        %v311 = vsel %vm292, %v309, %v310
        %vm312 = vcmp.ge.s32.totalorder %v289, 1
        %v313 = vsel %vm312, %v311, 0.0
        %s314 = sld [smem:[#allocation10 + $0x3]]
        %s315 = sld [smem:[#allocation10 + $0x83]]
        %v316 = vstv %s314
        %v317 = vstv %s315
        %v318 = vsel %vm292, %v316, %v317
        %s319 = sld [smem:[#allocation10 + $0x4]]
        %s320 = sld [smem:[#allocation10 + $0x84]]
        %v321 = vstv %s319
        %v322 = vstv %s320
        %v323 = vsel %vm292, %v321, %v322
        %vm324 = vcmp.lt.s32.totalorder %v289, 127
        %v325 = vsel %vm324, %v323, 0.0
        %s326 = sld [smem:[#allocation10 + $0x5]]
        %s327 = sld [smem:[#allocation10 + $0x85]]
        %v328 = vstv %s326
        %v329 = vstv %s327
        %v330 = vsel %vm292, %v328, %v329
        %vm331 = vcmp.lt.s32.totalorder %v289, 126
        %v332 = vsel %vm331, %v330, 0.0
        %s333 = sld [smem:[#allocation10 + $0x6]]
        %s334 = sld [smem:[#allocation10 + $0x86]]
        %v335 = vstv %s333
        %v336 = vstv %s334
        %v337 = vsel %vm292, %v335, %v336
        %vm338 = vcmp.lt.s32.totalorder %v289, 125
        %v339 = vsel %vm338, %v337, 0.0
        %s340 = sld [smem:[#allocation2]]
        %v341 = vld [vmem:[#allocation7] sm:$0xff]
        %v342 = vld [vmem:[#allocation7 + $0x8] sm:$0xff]
        %v343 = vld [vmem:[#allocation7 + $0x10] sm:$0xff]
        %v344 = vld [vmem:[#allocation7 + $0x18] sm:$0xff]
        %v345 = vld [vmem:[#allocation9] sm:$0xff]
        %v346 = vld [vmem:[#allocation9 + $0x8] sm:$0xff]
        %v347 = vld [vmem:[#allocation9 + $0x10] sm:$0xff]
        %v348 = vld [vmem:[#allocation9 + $0x18] sm:$0xff]
        %v349 = vld [vmem:[%s246] sm:$0xff]
        %v350 = vld [vmem:[%s246 + $0x8] sm:$0xff]
        %v351 = vld [vmem:[%s246 + $0x10] sm:$0xff]
        %v352 = vld [vmem:[%s246 + $0x18] sm:$0xff]
        %353 = vmax.xlane.f32.xlu0 %v349
        %v354 = vpop.xlane.xlu0 %353
        %355 = vmax.xlane.f32.xlu0 %v350
        %v356 = vpop.xlane.xlu0 %355
        %357 = vmax.xlane.f32.xlu0 %v351
        %v358 = vpop.xlane.xlu0 %357
        %359 = vmax.xlane.f32.xlu0 %v352
        %v360 = vpop.xlane.xlu0 %359
        %361 = vadd.xlane.f32.xlu0 %v349
        %v362 = vpop.xlane.xlu0 %361
        %363 = vadd.xlane.f32.xlu0 %v350
        %v364 = vpop.xlane.xlu0 %363
        %365 = vadd.xlane.f32.xlu0 %v351
        %v366 = vpop.xlane.xlu0 %365
        %367 = vadd.xlane.f32.xlu0 %v352
        %v368 = vpop.xlane.xlu0 %367
        %v369 = vrcp.pop 128.0
        %v370 = vmul.f32 %v362, %v369
        %v371 = vmul.f32 %v364, %v369
        %v372 = vmul.f32 %v366, %v369
        %v373 = vmul.f32 %v368, %v369
        %vm374 = vcmask 7168
        %v375 = vsel %vm374, %v354, %v370
        %v376 = vsel %vm374, %v356, %v371
        %v377 = vsel %vm374, %v358, %v372
        %v378 = vsel %vm374, %v360, %v373
        %380 = vset.pattern.permute.xlu0 0
        %381 = vperm.xlu0 %380, %v341
        %v382 = vpop.permute.xlu0 %381
        %385 = vset.pattern.permute.xlu0 0
        %386 = vperm.xlu0 %385, %v342
        %v387 = vpop.permute.xlu0 %386
        %390 = vset.pattern.permute.xlu0 0
        %391 = vperm.xlu0 %390, %v343
        %v392 = vpop.permute.xlu0 %391
        %395 = vset.pattern.permute.xlu0 0
        %396 = vperm.xlu0 %395, %v344
        %v397 = vpop.permute.xlu0 %396
        %v399 = vmul.f32 %v382, %v375
        %v400 = vmul.f32 %v387, %v376
        %v401 = vmul.f32 %v392, %v377
        %v402 = vmul.f32 %v397, %v378
        %vm403 = vcmask 15360
        %v404 = vsel %vm403, %v399, 0.0
        %v405 = vsel %vm403, %v400, 0.0
        %v406 = vadd.f32 %v404, %v405
        %v407 = vsel %vm403, %v401, 0.0
        %v408 = vadd.f32 %v406, %v407
        %v409 = vsel %vm403, %v402, 0.0
        %v410 = vadd.f32 %v408, %v409
        %v411 = vrot.slane %v410, 4
        %v412 = vadd.f32 %v410, %v411
        %v413 = vrot.slane %v412, 2
        %v414 = vadd.f32 %v412, %v413
        %v415 = vrot.slane %v414, 1
        %v416 = vadd.f32 %v414, %v415
        %v417 = vmax.f32 %v416, 0.0
        %419 = vrot.lane.b32.xlu0 %v417, 127
        %v420 = vpop.permute.xlu0 %419
        %v422 = vadd.f32 %v417, %v420
        %v423 = vlaneseq
        %v424 = vshrl.u32 %v423, 7
        %v425 = vsub.s32 0, %v424
        %v426 = vrot.slane %v422, %v425
        %v427 = vmul.f32 %v345, %v426
        %v428 = vmul.f32 %v346, %v426
        %v429 = vmul.f32 %v347, %v426
        %v430 = vmul.f32 %v348, %v426
        %v431 = vadd.f32 %v427, 0.0
        %v432 = vadd.f32 %v428, 0.0
        %v433 = vadd.f32 %v429, 0.0
        %v434 = vadd.f32 %v430, 0.0
        %435 = vset.pattern.permute.xlu0 1
        %436 = vperm.xlu0 %435, %v341
        %v437 = vpop.permute.xlu0 %436
        %439 = vset.pattern.permute.xlu0 1
        %440 = vperm.xlu0 %439, %v342
        %v441 = vpop.permute.xlu0 %440
        %443 = vset.pattern.permute.xlu0 1
        %444 = vperm.xlu0 %443, %v343
        %v445 = vpop.permute.xlu0 %444
        %447 = vset.pattern.permute.xlu0 1
        %448 = vperm.xlu0 %447, %v344
        %v449 = vpop.permute.xlu0 %448
        %v451 = vmul.f32 %v437, %v375
        %v452 = vmul.f32 %v441, %v376
        %v453 = vmul.f32 %v445, %v377
        %v454 = vmul.f32 %v449, %v378
        %v455 = vsel %vm403, %v451, 0.0
        %v456 = vsel %vm403, %v452, 0.0
        %v457 = vadd.f32 %v455, %v456
        %v458 = vsel %vm403, %v453, 0.0
        %v459 = vadd.f32 %v457, %v458
        %v460 = vsel %vm403, %v454, 0.0
        %v461 = vadd.f32 %v459, %v460
        %v462 = vrot.slane %v461, 4
        %v463 = vadd.f32 %v461, %v462
        %v464 = vrot.slane %v463, 2
        %v465 = vadd.f32 %v463, %v464
        %v466 = vrot.slane %v465, 1
        %v467 = vadd.f32 %v465, %v466
        %v468 = vmax.f32 %v467, 0.0
        %470 = vrot.lane.b32.xlu0 %v468, 127
        %v471 = vpop.permute.xlu0 %470
        %v473 = vadd.f32 %v468, %v471
        %v474 = vlaneseq
        %v475 = vshrl.u32 %v474, 7
        %v476 = vsub.s32 0, %v475
        %v477 = vrot.slane %v473, %v476
        %479 = vrot.lane.b32.xlu0 %v477, 1
        %v480 = vpop.permute.xlu0 %479
        %v482 = vmul.f32 %v345, %v480
        %v483 = vmul.f32 %v346, %v480
        %v484 = vmul.f32 %v347, %v480
        %v485 = vmul.f32 %v348, %v480
        %490 = vrot.lane.b32.xlu0 %v482, 127
        %v491 = vpop.permute.xlu0 %490
        %492 = vrot.lane.b32.xlu0 %v483, 127
        %v493 = vpop.permute.xlu0 %492
        %494 = vrot.lane.b32.xlu0 %v484, 127
        %v495 = vpop.permute.xlu0 %494
        %496 = vrot.lane.b32.xlu0 %v485, 127
        %v497 = vpop.permute.xlu0 %496
        %v502 = vadd.f32 %v431, %v491
        %v503 = vadd.f32 %v432, %v493
        %v504 = vadd.f32 %v433, %v495
        %v505 = vadd.f32 %v434, %v497
        %v506 = vxor.u32 %v502, 2147483648
        %v507 = vxor.u32 %v503, 2147483648
        %v508 = vxor.u32 %v504, 2147483648
        %v509 = vxor.u32 %v505, 2147483648
        %v510 = vmul.f32 %v506, 1.442695
        %v511 = vpow.pop %v510
        %v512 = vmul.f32 %v507, 1.442695
        %v513 = vpow.pop %v512
        %v514 = vmul.f32 %v508, 1.442695
        %v515 = vpow.pop %v514
        %v516 = vmul.f32 %v509, 1.442695
        %v517 = vpow.pop %v516
        %v518 = vadd.f32 %v511, 1.0
        %v519 = vadd.f32 %v513, 1.0
        %v520 = vadd.f32 %v515, 1.0
        %v521 = vadd.f32 %v517, 1.0
        %v522 = vrcp.pop %v518
        %v523 = vmul.f32 1.0, %v522
        %v524 = vrcp.pop %v519
        %v525 = vmul.f32 1.0, %v524
        %v526 = vrcp.pop %v520
        %v527 = vmul.f32 1.0, %v526
        %v528 = vrcp.pop %v521
        %v529 = vmul.f32 1.0, %v528
        %531 = vset.pattern.permute.xlu0 0
        %532 = vperm.xlu0 %531, %v523
        %v533 = vpop.permute.xlu0 %532
        %536 = vset.pattern.permute.xlu0 0
        %537 = vperm.xlu0 %536, %v525
        %v538 = vpop.permute.xlu0 %537
        %541 = vset.pattern.permute.xlu0 0
        %542 = vperm.xlu0 %541, %v527
        %v543 = vpop.permute.xlu0 %542
        %546 = vset.pattern.permute.xlu0 0
        %547 = vperm.xlu0 %546, %v529
        %v548 = vpop.permute.xlu0 %547
        %v550 = vmul.f32 %v349, %v533
        %v551 = vmul.f32 %v350, %v538
        %v552 = vmul.f32 %v351, %v543
        %v553 = vmul.f32 %v352, %v548
        %v554 = vmax.f32 %v550, %v551
        %v555 = vmax.f32 %v552, %v553
        %v556 = vmax.f32 %v554, %v555
        %v557 = vrot.slane %v556, 4
        %v558 = vmax.f32 %v556, %v557
        %v559 = vrot.slane %v558, 2
        %v560 = vmax.f32 %v558, %v559
        %v561 = vrot.slane %v560, 1
        %v562 = vmax.f32 %v560, %v561
        %v563 = vadd.f32 %v550, %v551
        %v564 = vadd.f32 %v563, %v552
        %v565 = vadd.f32 %v564, %v553
        %v566 = vrot.slane %v565, 4
        %v567 = vadd.f32 %v565, %v566
        %v568 = vrot.slane %v567, 2
        %v569 = vadd.f32 %v567, %v568
        %v570 = vrot.slane %v569, 1
        %v571 = vadd.f32 %v569, %v570
        %v572 = vrcp.pop 32.0
        %v573 = vmul.f32 %v571, %v572
        %vm574 = vcmask 1040384
        %v575 = vsel %vm574, %v562, %v573
        %576 = vrot.lane.b32.xlu0 %v575, 3
        %v577 = vpop.permute.xlu0 %576
        %v578 = vmul.f32 %v299, %v577
        %v579 = vadd.f32 %v578, 0.0
        %580 = vrot.lane.b32.xlu0 %v575, 2
        %v581 = vpop.permute.xlu0 %580
        %v582 = vmul.f32 %v306, %v581
        %v583 = vadd.f32 %v579, %v582
        %584 = vrot.lane.b32.xlu0 %v575, 1
        %v585 = vpop.permute.xlu0 %584
        %v586 = vmul.f32 %v313, %v585
        %v587 = vadd.f32 %v583, %v586
        %v588 = vmul.f32 %v318, %v575
        %v589 = vadd.f32 %v587, %v588
        %590 = vrot.lane.b32.xlu0 %v575, 127
        %v591 = vpop.permute.xlu0 %590
        %v592 = vmul.f32 %v325, %v591
        %v593 = vadd.f32 %v589, %v592
        %594 = vrot.lane.b32.xlu0 %v575, 126
        %v595 = vpop.permute.xlu0 %594
        %v596 = vmul.f32 %v332, %v595
        %v597 = vadd.f32 %v593, %v596
        %598 = vrot.lane.b32.xlu0 %v575, 125
        %v599 = vpop.permute.xlu0 %598
        %v600 = vmul.f32 %v339, %v599
        %v601 = vadd.f32 %v597, %v600
        %vm602 = vcmask 1041408
        %v603 = vsel %vm602, %v601, 0.0
        %v604 = vrot.slane %v603, 4
        %v605 = vadd.f32 %v603, %v604
        %v606 = vrot.slane %v605, 2
        %v607 = vadd.f32 %v605, %v606
        %v608 = vrot.slane %v607, 1
        %v609 = vadd.f32 %v607, %v608
        %v610 = vstv %s340
        %v611 = vadd.f32 %v609, %v610
        %v612 = vxor.u32 %v611, 2147483648
        %v613 = vmul.f32 %v612, 1.442695
        %v614 = vpow.pop %v613
        %v615 = vadd.f32 %v614, 1.0
        %v616 = vrcp.pop %v615
        %v617 = vmul.f32 1.0, %v616
        %v618 = vmul.f32 %v550, %v617
        %v619 = vmul.f32 %v551, %v617
        %v620 = vmul.f32 %v552, %v617
        %v621 = vmul.f32 %v553, %v617
        %v622 = vadd.f32 %v618, %v349
        %v623 = vadd.f32 %v619, %v350
        %v624 = vadd.f32 %v620, %v351
        %v625 = vadd.f32 %v621, %v352
        %626 = vst [vmem:[%s285] sm:$0xff] %v622
        %627 = vst [vmem:[%s285 + $0x8] sm:$0xff] %v623
        %628 = vst [vmem:[%s285 + $0x10] sm:$0xff] %v624
        %629 = vst [vmem:[%s285 + $0x18] sm:$0xff] %v625
        %s630 = scalar_lea.vmem %s246, 32 [#allocation3]
        %v631 = vld [vmem:[%s630] sm:$0xff]
        %v632 = vld [vmem:[%s630 + $0x8] sm:$0xff]
        %v633 = vld [vmem:[%s630 + $0x10] sm:$0xff]
        %v634 = vld [vmem:[%s630 + $0x18] sm:$0xff]
        %635 = vmax.xlane.f32.xlu0 %v631
        %v636 = vpop.xlane.xlu0 %635
        %637 = vmax.xlane.f32.xlu0 %v632
        %v638 = vpop.xlane.xlu0 %637
        %639 = vmax.xlane.f32.xlu0 %v633
        %v640 = vpop.xlane.xlu0 %639
        %641 = vmax.xlane.f32.xlu0 %v634
        %v642 = vpop.xlane.xlu0 %641
        %643 = vadd.xlane.f32.xlu0 %v631
        %v644 = vpop.xlane.xlu0 %643
        %645 = vadd.xlane.f32.xlu0 %v632
        %v646 = vpop.xlane.xlu0 %645
        %647 = vadd.xlane.f32.xlu0 %v633
        %v648 = vpop.xlane.xlu0 %647
        %649 = vadd.xlane.f32.xlu0 %v634
        %v650 = vpop.xlane.xlu0 %649
        %v651 = vmul.f32 %v644, %v369
        %v652 = vmul.f32 %v646, %v369
        %v653 = vmul.f32 %v648, %v369
        %v654 = vmul.f32 %v650, %v369
        %v655 = vsel %vm374, %v636, %v651
        %v656 = vsel %vm374, %v638, %v652
        %v657 = vsel %vm374, %v640, %v653
        %v658 = vsel %vm374, %v642, %v654
        %v659 = vmul.f32 %v382, %v655
        %v660 = vmul.f32 %v387, %v656
        %v661 = vmul.f32 %v392, %v657
        %v662 = vmul.f32 %v397, %v658
        %v663 = vsel %vm403, %v659, 0.0
        %v664 = vsel %vm403, %v660, 0.0
        %v665 = vadd.f32 %v663, %v664
        %v666 = vsel %vm403, %v661, 0.0
        %v667 = vadd.f32 %v665, %v666
        %v668 = vsel %vm403, %v662, 0.0
        %v669 = vadd.f32 %v667, %v668
        %v670 = vrot.slane %v669, 4
        %v671 = vadd.f32 %v669, %v670
        %v672 = vrot.slane %v671, 2
        %v673 = vadd.f32 %v671, %v672
        %v674 = vrot.slane %v673, 1
        %v675 = vadd.f32 %v673, %v674
        %v676 = vmax.f32 %v675, 0.0
        %678 = vrot.lane.b32.xlu0 %v676, 127
        %v679 = vpop.permute.xlu0 %678
        %v681 = vadd.f32 %v676, %v679
        %v682 = vlaneseq
        %v683 = vshrl.u32 %v682, 7
        %v684 = vsub.s32 0, %v683
        %v685 = vrot.slane %v681, %v684
        %v686 = vmul.f32 %v345, %v685
        %v687 = vmul.f32 %v346, %v685
        %v688 = vmul.f32 %v347, %v685
        %v689 = vmul.f32 %v348, %v685
        %v690 = vadd.f32 %v686, 0.0
        %v691 = vadd.f32 %v687, 0.0
        %v692 = vadd.f32 %v688, 0.0
        %v693 = vadd.f32 %v689, 0.0
        %v694 = vmul.f32 %v437, %v655
        %v695 = vmul.f32 %v441, %v656
        %v696 = vmul.f32 %v445, %v657
        %v697 = vmul.f32 %v449, %v658
        %v698 = vsel %vm403, %v694, 0.0
        %v699 = vsel %vm403, %v695, 0.0
        %v700 = vadd.f32 %v698, %v699
        %v701 = vsel %vm403, %v696, 0.0
        %v702 = vadd.f32 %v700, %v701
        %v703 = vsel %vm403, %v697, 0.0
        %v704 = vadd.f32 %v702, %v703
        %v705 = vrot.slane %v704, 4
        %v706 = vadd.f32 %v704, %v705
        %v707 = vrot.slane %v706, 2
        %v708 = vadd.f32 %v706, %v707
        %v709 = vrot.slane %v708, 1
        %v710 = vadd.f32 %v708, %v709
        %v711 = vmax.f32 %v710, 0.0
        %713 = vrot.lane.b32.xlu0 %v711, 127
        %v714 = vpop.permute.xlu0 %713
        %v716 = vadd.f32 %v711, %v714
        %v717 = vlaneseq
        %v718 = vshrl.u32 %v717, 7
        %v719 = vsub.s32 0, %v718
        %v720 = vrot.slane %v716, %v719
        %722 = vrot.lane.b32.xlu0 %v720, 1
        %v723 = vpop.permute.xlu0 %722
        %v725 = vmul.f32 %v345, %v723
        %v726 = vmul.f32 %v346, %v723
        %v727 = vmul.f32 %v347, %v723
        %v728 = vmul.f32 %v348, %v723
        %733 = vrot.lane.b32.xlu0 %v725, 127
        %v734 = vpop.permute.xlu0 %733
        %735 = vrot.lane.b32.xlu0 %v726, 127
        %v736 = vpop.permute.xlu0 %735
        %737 = vrot.lane.b32.xlu0 %v727, 127
        %v738 = vpop.permute.xlu0 %737
        %739 = vrot.lane.b32.xlu0 %v728, 127
        %v740 = vpop.permute.xlu0 %739
        %v745 = vadd.f32 %v690, %v734
        %v746 = vadd.f32 %v691, %v736
        %v747 = vadd.f32 %v692, %v738
        %v748 = vadd.f32 %v693, %v740
        %v749 = vxor.u32 %v745, 2147483648
        %v750 = vxor.u32 %v746, 2147483648
        %v751 = vxor.u32 %v747, 2147483648
        %v752 = vxor.u32 %v748, 2147483648
        %v753 = vmul.f32 %v749, 1.442695
        %v754 = vpow.pop %v753
        %v755 = vmul.f32 %v750, 1.442695
        %v756 = vpow.pop %v755
        %v757 = vmul.f32 %v751, 1.442695
        %v758 = vpow.pop %v757
        %v759 = vmul.f32 %v752, 1.442695
        %v760 = vpow.pop %v759
        %v761 = vadd.f32 %v754, 1.0
        %v762 = vadd.f32 %v756, 1.0
        %v763 = vadd.f32 %v758, 1.0
        %v764 = vadd.f32 %v760, 1.0
        %v765 = vrcp.pop %v761
        %v766 = vmul.f32 1.0, %v765
        %v767 = vrcp.pop %v762
        %v768 = vmul.f32 1.0, %v767
        %v769 = vrcp.pop %v763
        %v770 = vmul.f32 1.0, %v769
        %v771 = vrcp.pop %v764
        %v772 = vmul.f32 1.0, %v771
        %774 = vset.pattern.permute.xlu0 0
        %775 = vperm.xlu0 %774, %v766
        %v776 = vpop.permute.xlu0 %775
        %779 = vset.pattern.permute.xlu0 0
        %780 = vperm.xlu0 %779, %v768
        %v781 = vpop.permute.xlu0 %780
        %784 = vset.pattern.permute.xlu0 0
        %785 = vperm.xlu0 %784, %v770
        %v786 = vpop.permute.xlu0 %785
        %789 = vset.pattern.permute.xlu0 0
        %790 = vperm.xlu0 %789, %v772
        %v791 = vpop.permute.xlu0 %790
        %v793 = vmul.f32 %v631, %v776
        %v794 = vmul.f32 %v632, %v781
        %v795 = vmul.f32 %v633, %v786
        %v796 = vmul.f32 %v634, %v791
        %v797 = vmax.f32 %v793, %v794
        %v798 = vmax.f32 %v795, %v796
        %v799 = vmax.f32 %v797, %v798
        %v800 = vrot.slane %v799, 4
        %v801 = vmax.f32 %v799, %v800
        %v802 = vrot.slane %v801, 2
        %v803 = vmax.f32 %v801, %v802
        %v804 = vrot.slane %v803, 1
        %v805 = vmax.f32 %v803, %v804
        %v806 = vadd.f32 %v793, %v794
        %v807 = vadd.f32 %v806, %v795
        %v808 = vadd.f32 %v807, %v796
        %v809 = vrot.slane %v808, 4
        %v810 = vadd.f32 %v808, %v809
        %v811 = vrot.slane %v810, 2
        %v812 = vadd.f32 %v810, %v811
        %v813 = vrot.slane %v812, 1
        %v814 = vadd.f32 %v812, %v813
        %v815 = vmul.f32 %v814, %v572
        %v816 = vsel %vm574, %v805, %v815
        %817 = vrot.lane.b32.xlu0 %v816, 3
        %v818 = vpop.permute.xlu0 %817
        %v819 = vmul.f32 %v299, %v818
        %v820 = vadd.f32 %v819, 0.0
        %821 = vrot.lane.b32.xlu0 %v816, 2
        %v822 = vpop.permute.xlu0 %821
        %v823 = vmul.f32 %v306, %v822
        %v824 = vadd.f32 %v820, %v823
        %825 = vrot.lane.b32.xlu0 %v816, 1
        %v826 = vpop.permute.xlu0 %825
        %v827 = vmul.f32 %v313, %v826
        %v828 = vadd.f32 %v824, %v827
        %v829 = vmul.f32 %v318, %v816
        %v830 = vadd.f32 %v828, %v829
        %831 = vrot.lane.b32.xlu0 %v816, 127
        %v832 = vpop.permute.xlu0 %831
        %v833 = vmul.f32 %v325, %v832
        %v834 = vadd.f32 %v830, %v833
        %835 = vrot.lane.b32.xlu0 %v816, 126
        %v836 = vpop.permute.xlu0 %835
        %v837 = vmul.f32 %v332, %v836
        %v838 = vadd.f32 %v834, %v837
        %839 = vrot.lane.b32.xlu0 %v816, 125
        %v840 = vpop.permute.xlu0 %839
        %v841 = vmul.f32 %v339, %v840
        %v842 = vadd.f32 %v838, %v841
        %v843 = vsel %vm602, %v842, 0.0
        %v844 = vrot.slane %v843, 4
        %v845 = vadd.f32 %v843, %v844
        %v846 = vrot.slane %v845, 2
        %v847 = vadd.f32 %v845, %v846
        %v848 = vrot.slane %v847, 1
        %v849 = vadd.f32 %v847, %v848
        %v850 = vadd.f32 %v849, %v610
        %v851 = vxor.u32 %v850, 2147483648
        %v852 = vmul.f32 %v851, 1.442695
        %v853 = vpow.pop %v852
        %v854 = vadd.f32 %v853, 1.0
        %v855 = vrcp.pop %v854
        %v856 = vmul.f32 1.0, %v855
        %v857 = vmul.f32 %v793, %v856
        %v858 = vmul.f32 %v794, %v856
        %v859 = vmul.f32 %v795, %v856
        %v860 = vmul.f32 %v796, %v856
        %v861 = vadd.f32 %v857, %v631
        %v862 = vadd.f32 %v858, %v632
        %v863 = vadd.f32 %v859, %v633
        %v864 = vadd.f32 %v860, %v634
        %s865 = scalar_lea.vmem %s285, 32 [#allocation11]
        %866 = vst [vmem:[%s865] sm:$0xff] %v861
        %867 = vst [vmem:[%s865 + $0x8] sm:$0xff] %v862
        %868 = vst [vmem:[%s865 + $0x10] sm:$0xff] %v863
        %869 = vst [vmem:[%s865 + $0x18] sm:$0xff] %v864
        %s870 = scalar_lea.vmem %s246, 64 [#allocation3]
        %v871 = vld [vmem:[%s870] sm:$0xff]
        %v872 = vld [vmem:[%s870 + $0x8] sm:$0xff]
        %v873 = vld [vmem:[%s870 + $0x10] sm:$0xff]
        %v874 = vld [vmem:[%s870 + $0x18] sm:$0xff]
        %875 = vmax.xlane.f32.xlu0 %v871
        %v876 = vpop.xlane.xlu0 %875
        %877 = vmax.xlane.f32.xlu0 %v872
        %v878 = vpop.xlane.xlu0 %877
        %879 = vmax.xlane.f32.xlu0 %v873
        %v880 = vpop.xlane.xlu0 %879
        %881 = vmax.xlane.f32.xlu0 %v874
        %v882 = vpop.xlane.xlu0 %881
        %883 = vadd.xlane.f32.xlu0 %v871
        %v884 = vpop.xlane.xlu0 %883
        %885 = vadd.xlane.f32.xlu0 %v872
        %v886 = vpop.xlane.xlu0 %885
        %887 = vadd.xlane.f32.xlu0 %v873
        %v888 = vpop.xlane.xlu0 %887
        %889 = vadd.xlane.f32.xlu0 %v874
        %v890 = vpop.xlane.xlu0 %889
        %v891 = vmul.f32 %v884, %v369
        %v892 = vmul.f32 %v886, %v369
        %v893 = vmul.f32 %v888, %v369
        %v894 = vmul.f32 %v890, %v369
        %v895 = vsel %vm374, %v876, %v891
        %v896 = vsel %vm374, %v878, %v892
        %v897 = vsel %vm374, %v880, %v893
        %v898 = vsel %vm374, %v882, %v894
        %v899 = vmul.f32 %v382, %v895
        %v900 = vmul.f32 %v387, %v896
        %v901 = vmul.f32 %v392, %v897
        %v902 = vmul.f32 %v397, %v898
        %v903 = vsel %vm403, %v899, 0.0
        %v904 = vsel %vm403, %v900, 0.0
        %v905 = vadd.f32 %v903, %v904
        %v906 = vsel %vm403, %v901, 0.0
        %v907 = vadd.f32 %v905, %v906
        %v908 = vsel %vm403, %v902, 0.0
        %v909 = vadd.f32 %v907, %v908
        %v910 = vrot.slane %v909, 4
        %v911 = vadd.f32 %v909, %v910
        %v912 = vrot.slane %v911, 2
        %v913 = vadd.f32 %v911, %v912
        %v914 = vrot.slane %v913, 1
        %v915 = vadd.f32 %v913, %v914
        %v916 = vmax.f32 %v915, 0.0
        %918 = vrot.lane.b32.xlu0 %v916, 127
        %v919 = vpop.permute.xlu0 %918
        %v921 = vadd.f32 %v916, %v919
        %v922 = vlaneseq
        %v923 = vshrl.u32 %v922, 7
        %v924 = vsub.s32 0, %v923
        %v925 = vrot.slane %v921, %v924
        %v926 = vmul.f32 %v345, %v925
        %v927 = vmul.f32 %v346, %v925
        %v928 = vmul.f32 %v347, %v925
        %v929 = vmul.f32 %v348, %v925
        %v930 = vadd.f32 %v926, 0.0
        %v931 = vadd.f32 %v927, 0.0
        %v932 = vadd.f32 %v928, 0.0
        %v933 = vadd.f32 %v929, 0.0
        %v934 = vmul.f32 %v437, %v895
        %v935 = vmul.f32 %v441, %v896
        %v936 = vmul.f32 %v445, %v897
        %v937 = vmul.f32 %v449, %v898
        %v938 = vsel %vm403, %v934, 0.0
        %v939 = vsel %vm403, %v935, 0.0
        %v940 = vadd.f32 %v938, %v939
        %v941 = vsel %vm403, %v936, 0.0
        %v942 = vadd.f32 %v940, %v941
        %v943 = vsel %vm403, %v937, 0.0
        %v944 = vadd.f32 %v942, %v943
        %v945 = vrot.slane %v944, 4
        %v946 = vadd.f32 %v944, %v945
        %v947 = vrot.slane %v946, 2
        %v948 = vadd.f32 %v946, %v947
        %v949 = vrot.slane %v948, 1
        %v950 = vadd.f32 %v948, %v949
        %v951 = vmax.f32 %v950, 0.0
        %953 = vrot.lane.b32.xlu0 %v951, 127
        %v954 = vpop.permute.xlu0 %953
        %v956 = vadd.f32 %v951, %v954
        %v957 = vlaneseq
        %v958 = vshrl.u32 %v957, 7
        %v959 = vsub.s32 0, %v958
        %v960 = vrot.slane %v956, %v959
        %962 = vrot.lane.b32.xlu0 %v960, 1
        %v963 = vpop.permute.xlu0 %962
        %v965 = vmul.f32 %v345, %v963
        %v966 = vmul.f32 %v346, %v963
        %v967 = vmul.f32 %v347, %v963
        %v968 = vmul.f32 %v348, %v963
        %973 = vrot.lane.b32.xlu0 %v965, 127
        %v974 = vpop.permute.xlu0 %973
        %975 = vrot.lane.b32.xlu0 %v966, 127
        %v976 = vpop.permute.xlu0 %975
        %977 = vrot.lane.b32.xlu0 %v967, 127
        %v978 = vpop.permute.xlu0 %977
        %979 = vrot.lane.b32.xlu0 %v968, 127
        %v980 = vpop.permute.xlu0 %979
        %v985 = vadd.f32 %v930, %v974
        %v986 = vadd.f32 %v931, %v976
        %v987 = vadd.f32 %v932, %v978
        %v988 = vadd.f32 %v933, %v980
        %v989 = vxor.u32 %v985, 2147483648
        %v990 = vxor.u32 %v986, 2147483648
        %v991 = vxor.u32 %v987, 2147483648
        %v992 = vxor.u32 %v988, 2147483648
        %v993 = vmul.f32 %v989, 1.442695
        %v994 = vpow.pop %v993
        %v995 = vmul.f32 %v990, 1.442695
        %v996 = vpow.pop %v995
        %v997 = vmul.f32 %v991, 1.442695
        %v998 = vpow.pop %v997
        %v999 = vmul.f32 %v992, 1.442695
        %v1000 = vpow.pop %v999
        %v1001 = vadd.f32 %v994, 1.0
        %v1002 = vadd.f32 %v996, 1.0
        %v1003 = vadd.f32 %v998, 1.0
        %v1004 = vadd.f32 %v1000, 1.0
        %v1005 = vrcp.pop %v1001
        %v1006 = vmul.f32 1.0, %v1005
        %v1007 = vrcp.pop %v1002
        %v1008 = vmul.f32 1.0, %v1007
        %v1009 = vrcp.pop %v1003
        %v1010 = vmul.f32 1.0, %v1009
        %v1011 = vrcp.pop %v1004
        %v1012 = vmul.f32 1.0, %v1011
        %1014 = vset.pattern.permute.xlu0 0
        %1015 = vperm.xlu0 %1014, %v1006
        %v1016 = vpop.permute.xlu0 %1015
        %1019 = vset.pattern.permute.xlu0 0
        %1020 = vperm.xlu0 %1019, %v1008
        %v1021 = vpop.permute.xlu0 %1020
        %1024 = vset.pattern.permute.xlu0 0
        %1025 = vperm.xlu0 %1024, %v1010
        %v1026 = vpop.permute.xlu0 %1025
        %1029 = vset.pattern.permute.xlu0 0
        %1030 = vperm.xlu0 %1029, %v1012
        %v1031 = vpop.permute.xlu0 %1030
        %v1033 = vmul.f32 %v871, %v1016
        %v1034 = vmul.f32 %v872, %v1021
        %v1035 = vmul.f32 %v873, %v1026
        %v1036 = vmul.f32 %v874, %v1031
        %v1037 = vmax.f32 %v1033, %v1034
        %v1038 = vmax.f32 %v1035, %v1036
        %v1039 = vmax.f32 %v1037, %v1038
        %v1040 = vrot.slane %v1039, 4
        %v1041 = vmax.f32 %v1039, %v1040
        %v1042 = vrot.slane %v1041, 2
        %v1043 = vmax.f32 %v1041, %v1042
        %v1044 = vrot.slane %v1043, 1
        %v1045 = vmax.f32 %v1043, %v1044
        %v1046 = vadd.f32 %v1033, %v1034
        %v1047 = vadd.f32 %v1046, %v1035
        %v1048 = vadd.f32 %v1047, %v1036
        %v1049 = vrot.slane %v1048, 4
        %v1050 = vadd.f32 %v1048, %v1049
        %v1051 = vrot.slane %v1050, 2
        %v1052 = vadd.f32 %v1050, %v1051
        %v1053 = vrot.slane %v1052, 1
        %v1054 = vadd.f32 %v1052, %v1053
        %v1055 = vmul.f32 %v1054, %v572
        %v1056 = vsel %vm574, %v1045, %v1055
        %1057 = vrot.lane.b32.xlu0 %v1056, 3
        %v1058 = vpop.permute.xlu0 %1057
        %v1059 = vmul.f32 %v299, %v1058
        %v1060 = vadd.f32 %v1059, 0.0
        %1061 = vrot.lane.b32.xlu0 %v1056, 2
        %v1062 = vpop.permute.xlu0 %1061
        %v1063 = vmul.f32 %v306, %v1062
        %v1064 = vadd.f32 %v1060, %v1063
        %1065 = vrot.lane.b32.xlu0 %v1056, 1
        %v1066 = vpop.permute.xlu0 %1065
        %v1067 = vmul.f32 %v313, %v1066
        %v1068 = vadd.f32 %v1064, %v1067
        %v1069 = vmul.f32 %v318, %v1056
        %v1070 = vadd.f32 %v1068, %v1069
        %1071 = vrot.lane.b32.xlu0 %v1056, 127
        %v1072 = vpop.permute.xlu0 %1071
        %v1073 = vmul.f32 %v325, %v1072
        %v1074 = vadd.f32 %v1070, %v1073
        %1075 = vrot.lane.b32.xlu0 %v1056, 126
        %v1076 = vpop.permute.xlu0 %1075
        %v1077 = vmul.f32 %v332, %v1076
        %v1078 = vadd.f32 %v1074, %v1077
        %1079 = vrot.lane.b32.xlu0 %v1056, 125
        %v1080 = vpop.permute.xlu0 %1079
        %v1081 = vmul.f32 %v339, %v1080
        %v1082 = vadd.f32 %v1078, %v1081
        %v1083 = vsel %vm602, %v1082, 0.0
        %v1084 = vrot.slane %v1083, 4
        %v1085 = vadd.f32 %v1083, %v1084
        %v1086 = vrot.slane %v1085, 2
        %v1087 = vadd.f32 %v1085, %v1086
        %v1088 = vrot.slane %v1087, 1
        %v1089 = vadd.f32 %v1087, %v1088
        %v1090 = vadd.f32 %v1089, %v610
        %v1091 = vxor.u32 %v1090, 2147483648
        %v1092 = vmul.f32 %v1091, 1.442695
        %v1093 = vpow.pop %v1092
        %v1094 = vadd.f32 %v1093, 1.0
        %v1095 = vrcp.pop %v1094
        %v1096 = vmul.f32 1.0, %v1095
        %v1097 = vmul.f32 %v1033, %v1096
        %v1098 = vmul.f32 %v1034, %v1096
        %v1099 = vmul.f32 %v1035, %v1096
        %v1100 = vmul.f32 %v1036, %v1096
        %v1101 = vadd.f32 %v1097, %v871
        %v1102 = vadd.f32 %v1098, %v872
        %v1103 = vadd.f32 %v1099, %v873
        %v1104 = vadd.f32 %v1100, %v874
        %s1105 = scalar_lea.vmem %s285, 64 [#allocation11]
        %1106 = vst [vmem:[%s1105] sm:$0xff] %v1101
        %1107 = vst [vmem:[%s1105 + $0x8] sm:$0xff] %v1102
        %1108 = vst [vmem:[%s1105 + $0x10] sm:$0xff] %v1103
        %1109 = vst [vmem:[%s1105 + $0x18] sm:$0xff] %v1104
        %s1110 = scalar_lea.vmem %s246, 96 [#allocation3]
        %v1111 = vld [vmem:[%s1110] sm:$0xff]
        %v1112 = vld [vmem:[%s1110 + $0x8] sm:$0xff]
        %v1113 = vld [vmem:[%s1110 + $0x10] sm:$0xff]
        %v1114 = vld [vmem:[%s1110 + $0x18] sm:$0xff]
        %1115 = vmax.xlane.f32.xlu0 %v1111
        %v1116 = vpop.xlane.xlu0 %1115
        %1117 = vmax.xlane.f32.xlu0 %v1112
        %v1118 = vpop.xlane.xlu0 %1117
        %1119 = vmax.xlane.f32.xlu0 %v1113
        %v1120 = vpop.xlane.xlu0 %1119
        %1121 = vmax.xlane.f32.xlu0 %v1114
        %v1122 = vpop.xlane.xlu0 %1121
        %1123 = vadd.xlane.f32.xlu0 %v1111
        %v1124 = vpop.xlane.xlu0 %1123
        %1125 = vadd.xlane.f32.xlu0 %v1112
        %v1126 = vpop.xlane.xlu0 %1125
        %1127 = vadd.xlane.f32.xlu0 %v1113
        %v1128 = vpop.xlane.xlu0 %1127
        %1129 = vadd.xlane.f32.xlu0 %v1114
        %v1130 = vpop.xlane.xlu0 %1129
        %v1131 = vmul.f32 %v1124, %v369
        %v1132 = vmul.f32 %v1126, %v369
        %v1133 = vmul.f32 %v1128, %v369
        %v1134 = vmul.f32 %v1130, %v369
        %v1135 = vsel %vm374, %v1116, %v1131
        %v1136 = vsel %vm374, %v1118, %v1132
        %v1137 = vsel %vm374, %v1120, %v1133
        %v1138 = vsel %vm374, %v1122, %v1134
        %v1139 = vmul.f32 %v382, %v1135
        %v1140 = vmul.f32 %v387, %v1136
        %v1141 = vmul.f32 %v392, %v1137
        %v1142 = vmul.f32 %v397, %v1138
        %v1143 = vsel %vm403, %v1139, 0.0
        %v1144 = vsel %vm403, %v1140, 0.0
        %v1145 = vadd.f32 %v1143, %v1144
        %v1146 = vsel %vm403, %v1141, 0.0
        %v1147 = vadd.f32 %v1145, %v1146
        %v1148 = vsel %vm403, %v1142, 0.0
        %v1149 = vadd.f32 %v1147, %v1148
        %v1150 = vrot.slane %v1149, 4
        %v1151 = vadd.f32 %v1149, %v1150
        %v1152 = vrot.slane %v1151, 2
        %v1153 = vadd.f32 %v1151, %v1152
        %v1154 = vrot.slane %v1153, 1
        %v1155 = vadd.f32 %v1153, %v1154
        %v1156 = vmax.f32 %v1155, 0.0
        %1158 = vrot.lane.b32.xlu0 %v1156, 127
        %v1159 = vpop.permute.xlu0 %1158
        %v1161 = vadd.f32 %v1156, %v1159
        %v1162 = vlaneseq
        %v1163 = vshrl.u32 %v1162, 7
        %v1164 = vsub.s32 0, %v1163
        %v1165 = vrot.slane %v1161, %v1164
        %v1166 = vmul.f32 %v345, %v1165
        %v1167 = vmul.f32 %v346, %v1165
        %v1168 = vmul.f32 %v347, %v1165
        %v1169 = vmul.f32 %v348, %v1165
        %v1170 = vadd.f32 %v1166, 0.0
        %v1171 = vadd.f32 %v1167, 0.0
        %v1172 = vadd.f32 %v1168, 0.0
        %v1173 = vadd.f32 %v1169, 0.0
        %v1174 = vmul.f32 %v437, %v1135
        %v1175 = vmul.f32 %v441, %v1136
        %v1176 = vmul.f32 %v445, %v1137
        %v1177 = vmul.f32 %v449, %v1138
        %v1178 = vsel %vm403, %v1174, 0.0
        %v1179 = vsel %vm403, %v1175, 0.0
        %v1180 = vadd.f32 %v1178, %v1179
        %v1181 = vsel %vm403, %v1176, 0.0
        %v1182 = vadd.f32 %v1180, %v1181
        %v1183 = vsel %vm403, %v1177, 0.0
        %v1184 = vadd.f32 %v1182, %v1183
        %v1185 = vrot.slane %v1184, 4
        %v1186 = vadd.f32 %v1184, %v1185
        %v1187 = vrot.slane %v1186, 2
        %v1188 = vadd.f32 %v1186, %v1187
        %v1189 = vrot.slane %v1188, 1
        %v1190 = vadd.f32 %v1188, %v1189
        %v1191 = vmax.f32 %v1190, 0.0
        %1193 = vrot.lane.b32.xlu0 %v1191, 127
        %v1194 = vpop.permute.xlu0 %1193
        %v1196 = vadd.f32 %v1191, %v1194
        %v1197 = vlaneseq
        %v1198 = vshrl.u32 %v1197, 7
        %v1199 = vsub.s32 0, %v1198
        %v1200 = vrot.slane %v1196, %v1199
        %1202 = vrot.lane.b32.xlu0 %v1200, 1
        %v1203 = vpop.permute.xlu0 %1202
        %v1205 = vmul.f32 %v345, %v1203
        %v1206 = vmul.f32 %v346, %v1203
        %v1207 = vmul.f32 %v347, %v1203
        %v1208 = vmul.f32 %v348, %v1203
        %1213 = vrot.lane.b32.xlu0 %v1205, 127
        %v1214 = vpop.permute.xlu0 %1213
        %1215 = vrot.lane.b32.xlu0 %v1206, 127
        %v1216 = vpop.permute.xlu0 %1215
        %1217 = vrot.lane.b32.xlu0 %v1207, 127
        %v1218 = vpop.permute.xlu0 %1217
        %1219 = vrot.lane.b32.xlu0 %v1208, 127
        %v1220 = vpop.permute.xlu0 %1219
        %v1225 = vadd.f32 %v1170, %v1214
        %v1226 = vadd.f32 %v1171, %v1216
        %v1227 = vadd.f32 %v1172, %v1218
        %v1228 = vadd.f32 %v1173, %v1220
        %v1229 = vxor.u32 %v1225, 2147483648
        %v1230 = vxor.u32 %v1226, 2147483648
        %v1231 = vxor.u32 %v1227, 2147483648
        %v1232 = vxor.u32 %v1228, 2147483648
        %v1233 = vmul.f32 %v1229, 1.442695
        %v1234 = vpow.pop %v1233
        %v1235 = vmul.f32 %v1230, 1.442695
        %v1236 = vpow.pop %v1235
        %v1237 = vmul.f32 %v1231, 1.442695
        %v1238 = vpow.pop %v1237
        %v1239 = vmul.f32 %v1232, 1.442695
        %v1240 = vpow.pop %v1239
        %v1241 = vadd.f32 %v1234, 1.0
        %v1242 = vadd.f32 %v1236, 1.0
        %v1243 = vadd.f32 %v1238, 1.0
        %v1244 = vadd.f32 %v1240, 1.0
        %v1245 = vrcp.pop %v1241
        %v1246 = vmul.f32 1.0, %v1245
        %v1247 = vrcp.pop %v1242
        %v1248 = vmul.f32 1.0, %v1247
        %v1249 = vrcp.pop %v1243
        %v1250 = vmul.f32 1.0, %v1249
        %v1251 = vrcp.pop %v1244
        %v1252 = vmul.f32 1.0, %v1251
        %1254 = vset.pattern.permute.xlu0 0
        %1255 = vperm.xlu0 %1254, %v1246
        %v1256 = vpop.permute.xlu0 %1255
        %1259 = vset.pattern.permute.xlu0 0
        %1260 = vperm.xlu0 %1259, %v1248
        %v1261 = vpop.permute.xlu0 %1260
        %1264 = vset.pattern.permute.xlu0 0
        %1265 = vperm.xlu0 %1264, %v1250
        %v1266 = vpop.permute.xlu0 %1265
        %1269 = vset.pattern.permute.xlu0 0
        %1270 = vperm.xlu0 %1269, %v1252
        %v1271 = vpop.permute.xlu0 %1270
        %v1273 = vmul.f32 %v1111, %v1256
        %v1274 = vmul.f32 %v1112, %v1261
        %v1275 = vmul.f32 %v1113, %v1266
        %v1276 = vmul.f32 %v1114, %v1271
        %v1277 = vmax.f32 %v1273, %v1274
        %v1278 = vmax.f32 %v1275, %v1276
        %v1279 = vmax.f32 %v1277, %v1278
        %v1280 = vrot.slane %v1279, 4
        %v1281 = vmax.f32 %v1279, %v1280
        %v1282 = vrot.slane %v1281, 2
        %v1283 = vmax.f32 %v1281, %v1282
        %v1284 = vrot.slane %v1283, 1
        %v1285 = vmax.f32 %v1283, %v1284
        %v1286 = vadd.f32 %v1273, %v1274
        %v1287 = vadd.f32 %v1286, %v1275
        %v1288 = vadd.f32 %v1287, %v1276
        %v1289 = vrot.slane %v1288, 4
        %v1290 = vadd.f32 %v1288, %v1289
        %v1291 = vrot.slane %v1290, 2
        %v1292 = vadd.f32 %v1290, %v1291
        %v1293 = vrot.slane %v1292, 1
        %v1294 = vadd.f32 %v1292, %v1293
        %v1295 = vmul.f32 %v1294, %v572
        %v1296 = vsel %vm574, %v1285, %v1295
        %1297 = vrot.lane.b32.xlu0 %v1296, 3
        %v1298 = vpop.permute.xlu0 %1297
        %v1299 = vmul.f32 %v299, %v1298
        %v1300 = vadd.f32 %v1299, 0.0
        %1301 = vrot.lane.b32.xlu0 %v1296, 2
        %v1302 = vpop.permute.xlu0 %1301
        %v1303 = vmul.f32 %v306, %v1302
        %v1304 = vadd.f32 %v1300, %v1303
        %1305 = vrot.lane.b32.xlu0 %v1296, 1
        %v1306 = vpop.permute.xlu0 %1305
        %v1307 = vmul.f32 %v313, %v1306
        %v1308 = vadd.f32 %v1304, %v1307
        %v1309 = vmul.f32 %v318, %v1296
        %v1310 = vadd.f32 %v1308, %v1309
        %1311 = vrot.lane.b32.xlu0 %v1296, 127
        %v1312 = vpop.permute.xlu0 %1311
        %v1313 = vmul.f32 %v325, %v1312
        %v1314 = vadd.f32 %v1310, %v1313
        %1315 = vrot.lane.b32.xlu0 %v1296, 126
        %v1316 = vpop.permute.xlu0 %1315
        %v1317 = vmul.f32 %v332, %v1316
        %v1318 = vadd.f32 %v1314, %v1317
        %1319 = vrot.lane.b32.xlu0 %v1296, 125
        %v1320 = vpop.permute.xlu0 %1319
        %v1321 = vmul.f32 %v339, %v1320
        %v1322 = vadd.f32 %v1318, %v1321
        %v1323 = vsel %vm602, %v1322, 0.0
        %v1324 = vrot.slane %v1323, 4
        %v1325 = vadd.f32 %v1323, %v1324
        %v1326 = vrot.slane %v1325, 2
        %v1327 = vadd.f32 %v1325, %v1326
        %v1328 = vrot.slane %v1327, 1
        %v1329 = vadd.f32 %v1327, %v1328
        %v1330 = vadd.f32 %v1329, %v610
        %v1331 = vxor.u32 %v1330, 2147483648
        %v1332 = vmul.f32 %v1331, 1.442695
        %v1333 = vpow.pop %v1332
        %v1334 = vadd.f32 %v1333, 1.0
        %v1335 = vrcp.pop %v1334
        %v1336 = vmul.f32 1.0, %v1335
        %v1337 = vmul.f32 %v1273, %v1336
        %v1338 = vmul.f32 %v1274, %v1336
        %v1339 = vmul.f32 %v1275, %v1336
        %v1340 = vmul.f32 %v1276, %v1336
        %v1341 = vadd.f32 %v1337, %v1111
        %v1342 = vadd.f32 %v1338, %v1112
        %v1343 = vadd.f32 %v1339, %v1113
        %v1344 = vadd.f32 %v1340, %v1114
        %s1345 = scalar_lea.vmem %s285, 96 [#allocation11]
        %1346 = vst [vmem:[%s1345] sm:$0xff] %v1341
        %1347 = vst [vmem:[%s1345 + $0x8] sm:$0xff] %v1342
        %1348 = vst [vmem:[%s1345 + $0x10] sm:$0xff] %v1343
        %1349 = vst [vmem:[%s1345 + $0x18] sm:$0xff] %v1344
        %s1350 = sand.u32 %s143, 1
        %s1351 = scalar_lea.sflag [#allocation5], %s1350
        %s1352 = sand.u32 %s143, 1
        %s1353 = smul.addr %s1352, 128
        %s1354 = scalar_lea.vmem [#allocation11], %s1353
        // Predicated region
        $region57: #{tpu_custom_call.1} parent=39 // pred_check
          %p1355 = pneg %p153
        $region58: #{tpu_custom_call.1} parent=39 // pred_check_branch
          %1357 = sbr.rel (%p1355) target = $region60
        $region59: #{tpu_custom_call.1} parent=39 // pred_region
          %s1358 = smul.u32 4, %s25
          %s1360 = ssub.s32 2048, 2048
          %1361 = vsyncadd %s1351, %s1360
          %s1362 = smul.addr %s1358, 4
          %s1363 = smul.addr %s1362, 128
          %s1364 = scalar_lea.hbm %s5, %s1363
          %s1365 = sshll.u32 %s1354, 4
          %s1366 = int_to_ptr.vmem [resolvable:$true] %s1365
          %1371 = dma.vmem_to_hbm [thread:$0]  %s1366, 2048, %s1364, %s1351, 128, 128, 8
        $region60: #{tpu_custom_call.1} parent=39 // pred_fallthru
          _
      $region40: #{tpu_custom_call.1} parent=5 // pred_fallthru
        _
      %p1372 = scmp.le.s32.totalorder 2, %s20
      // Predicated region
      $region61: #{tpu_custom_call.1} parent=5 // pred_check
        %p1373 = pneg %p1372
      $region62: #{tpu_custom_call.1} parent=5 // pred_check_branch
        %1375 = sbr.rel (%p1373) target = $region64
      $region63: #{tpu_custom_call.1} parent=5 // pred_region
        %s1376 = ssub.s32 %s20, 2
        // Predicated region
        $region65: #{tpu_custom_call.1} parent=63 // pred_check
          %p1377 = pneg %p159
        $region66: #{tpu_custom_call.1} parent=63 // pred_check_branch
          %1379 = sbr.rel (%p1377) target = $region68
        $region67: #{tpu_custom_call.1} parent=63 // pred_region
          %s1380 = sand.u32 %s144, 1
          %s1381 = scalar_lea.sflag [#allocation5], %s1380
          %s1382 = sand.u32 %s144, 1
          %s1383 = smul.addr %s1382, 128
          %s1384 = scalar_lea.vmem [#allocation11], %s1383
          %1385 = dma.done %s1381, 2048
        $region68: #{tpu_custom_call.1} parent=63 // pred_fallthru
          _
      $region64: #{tpu_custom_call.1} parent=5 // pred_fallthru
        _
    $region6: #{tpu_custom_call.1} parent=1 // loop_footer
      %s24 = sadd.s32 1, %s20
    $region7: #{tpu_custom_call.1} parent=1 // loop_footer_branch
      %19 = sbr.rel target = $region3
    $region8: #{tpu_custom_call.1} parent=1 // loop_exit
      _
    %1386 = vsyncpa [#allocation4], 1
    %s1387 = scalar_lea.sflag [#allocation4], 1
    %1388 = vsyncpa %s1387, 1
    %1389 = vsyncpa [#allocation8], 1
    %1390 = vsyncpa [#allocation5], 1
    %s1391 = scalar_lea.sflag [#allocation5], 1
    %1392 = vsyncpa %s1391, 1
    %1393 = vsyncpa [#allocation6], 1
    %s1394 = scalar_lea.sflag [#allocation6], 1
    %1395 = vsyncpa %s1394, 1

</llo_original>
